<compile_context>
chip_gen: v7x
topology: tpu7x:2x2x1
jax: 0.10.0
libtpu: 0.0.40
codegen_flags: <defaults>
</compile_context>

<pallas_src>
import functools

import jax
import jax.numpy as jnp
from jax.experimental import pallas as pl
from jax.experimental.pallas import tpu as pltpu

_LANE = 128


# ----------------------------- small helpers ---------------------------------


def _round_up(x, m):
    return ((x + m - 1) // m) * m


def _pad2(a, rows, cols, dtype=None):
    dtype = a.dtype if dtype is None else dtype
    out = jnp.zeros((rows, cols), dtype)
    return out.at[:a.shape[0], :a.shape[1]].set(a.astype(dtype))


def _vmem_capacity_bytes():
    # Generation-aware: 128 MiB/TC on v5e/v6e, 64 MiB/TC on v7x.
    try:
        return int(pltpu.get_tpu_info().vmem_capacity_bytes)
    except Exception:
        return 64 << 20                       # conservative default (v7x per-TC)


# ----------------------------- fused (A-resident) path ------------------------


def _gin_fused_kernel(adj_ref, h0_ref, w1_ref, ws_ref, bs_ref, wfc_ref,
                      o1_ref, o2_ref, o3_ref, o4_ref, o5_ref, of_ref, hbf_ref):
    # Everything VMEM-resident: adj bf16 (Npad,Npad), h0 bf16 (Npad,Cpad),
    # w1 f32 (Cpad,D), ws f32 (4,D,D), bs f32 (5,1,D), wfc bf16 (D,Dfc).
    a = adj_ref[...]                                             # bf16, read once
    out_refs = (o1_ref, o2_ref, o3_ref, o4_ref, o5_ref)

    # ---- layer 1: in_channels -> dim ----
    agg = jnp.dot(a, h0_ref[...], preferred_element_type=jnp.float32)
    h = jnp.tanh(jnp.dot(agg, w1_ref[...], preferred_element_type=jnp.float32)
                 + bs_ref[0])
    out_refs[0][...] = h
    hbf_ref[...] = h.astype(jnp.bfloat16)

    # ---- layers 2..5: dim -> dim (statically unrolled) ----
    for k in range(4):
        agg = jnp.dot(a, hbf_ref[...], preferred_element_type=jnp.float32)
        h = jnp.tanh(jnp.dot(agg, ws_ref[k], preferred_element_type=jnp.float32)
                     + bs_ref[k + 1])
        out_refs[k + 1][...] = h
        hbf_ref[...] = h.astype(jnp.bfloat16)

    # ---- fc1 (no bias); h5 is tanh-bounded -> bf16 operands are safe ----
    of_ref[...] = jnp.tanh(jnp.dot(hbf_ref[...], wfc_ref[...],
                                   preferred_element_type=jnp.float32))


def _gin_fused(adj_bf, h0_bf, w1, ws, bs, wfc_bf, vmem_cap):
    npad, cpad = h0_bf.shape
    d = w1.shape[1]
    dfc = wfc_bf.shape[1]
    cost = pl.CostEstimate(
        flops=2 * npad * npad * (cpad + 4 * d)
        + 2 * npad * cpad * d + 8 * npad * d * d + 2 * npad * d * dfc,
        transcendentals=npad * (5 * d + dfc),
        bytes_accessed=2 * npad * npad + 2 * npad * cpad
        + 4 * npad * (5 * d + dfc)
        + 4 * (cpad * d + 4 * d * d + 5 * d) + 2 * d * dfc)
    vmem_spec = pl.BlockSpec(memory_space=pltpu.MemorySpace.VMEM)
    return pl.pallas_call(
        _gin_fused_kernel,
        out_shape=tuple([jax.ShapeDtypeStruct((npad, d), jnp.float32)] * 5
                        + [jax.ShapeDtypeStruct((npad, dfc), jnp.float32)]),
        in_specs=[vmem_spec] * 6,
        out_specs=tuple([vmem_spec] * 6),
        scratch_shapes=[pltpu.VMEM((npad, d), jnp.bfloat16)],
        compiler_params=pltpu.CompilerParams(
            vmem_limit_bytes=int(min(vmem_cap * 7 // 8, 120 << 20))),
        cost_estimate=cost,
    )(adj_bf, h0_bf, w1, ws, bs, wfc_bf)


# ----------------------------- tiled (per-layer) path -------------------------


def _gin_layer_kernel(a_ref, h_ref, w_ref, b_ref, o_ref, obf_ref):
    # a_ref: (TM, Npad) int8 streamed row tile of A_hat (upcast rides in idle
    #        VALU slots); h_ref: (Npad, K) bf16 resident; w/b: f32 resident.
    agg = jnp.dot(a_ref[...].astype(jnp.bfloat16), h_ref[...],
                  preferred_element_type=jnp.float32)
    h = jnp.tanh(jnp.dot(agg, w_ref[...], preferred_element_type=jnp.float32)
                 + b_ref[...])
    o_ref[...] = h                                  # f32 for the final concat
    obf_ref[...] = h.astype(jnp.bfloat16)           # feeds next layer resident


def _gin_last_kernel(a_ref, h_ref, w_ref, b_ref, wfc_ref, o_ref, of_ref):
    # Layer 5 + fc1 fused so h5 never round-trips HBM before the fc matmul.
    agg = jnp.dot(a_ref[...].astype(jnp.bfloat16), h_ref[...],
                  preferred_element_type=jnp.float32)
    h = jnp.tanh(jnp.dot(agg, w_ref[...], preferred_element_type=jnp.float32)
                 + b_ref[...])
    o_ref[...] = h
    of_ref[...] = jnp.tanh(jnp.dot(h.astype(jnp.bfloat16), wfc_ref[...],
                                   preferred_element_type=jnp.float32))


def _tiled_compiler_params(vmem_cap):
    return pltpu.CompilerParams(
        dimension_semantics=("parallel",),           # row tiles shard over TCs
        vmem_limit_bytes=int(min(vmem_cap * 3 // 4, 112 << 20)))


def _gin_layer(adj_i8, h_bf, w, b, tm, vmem_cap):
    npad = adj_i8.shape[0]
    k = h_bf.shape[1]
    d = w.shape[1]
    cost = pl.CostEstimate(
        flops=2 * npad * npad * k + 2 * npad * k * d,
        transcendentals=npad * d,
        bytes_accessed=adj_i8.size + 2 * h_bf.size
        + 4 * (w.size + b.size) + 6 * npad * d)
    return pl.pallas_call(
        _gin_layer_kernel,
        out_shape=(jax.ShapeDtypeStruct((npad, d), jnp.float32),
                   jax.ShapeDtypeStruct((npad, d), jnp.bfloat16)),
        grid_spec=pltpu.PrefetchScalarGridSpec(
            num_scalar_prefetch=0,
            grid=(npad // tm,),
            in_specs=[
                pl.BlockSpec((tm, npad), lambda i: (i, 0)),   # int8 A row tile
                pl.BlockSpec((npad, k), lambda i: (0, 0)),    # bf16 H (resident)
                pl.BlockSpec((k, d), lambda i: (0, 0)),       # W (resident)
                pl.BlockSpec((1, d), lambda i: (0, 0)),       # b (resident)
            ],
            out_specs=[pl.BlockSpec((tm, d), lambda i: (i, 0)),
                       pl.BlockSpec((tm, d), lambda i: (i, 0))],
        ),
        compiler_params=_tiled_compiler_params(vmem_cap),
        cost_estimate=cost,
    )(adj_i8, h_bf, w, b)


def _gin_last_layer(adj_i8, h_bf, w, b, wfc_bf, tm, vmem_cap):
    npad = adj_i8.shape[0]
    k = h_bf.shape[1]
    d = w.shape[1]
    dfc = wfc_bf.shape[1]
    cost = pl.CostEstimate(
        flops=2 * npad * npad * k + 2 * npad * k * d + 2 * npad * d * dfc,
        transcendentals=npad * (d + dfc),
        bytes_accessed=adj_i8.size + 2 * h_bf.size + 4 * (w.size + b.size)
        + 2 * wfc_bf.size + 4 * npad * (d + dfc))
    return pl.pallas_call(
        _gin_last_kernel,
        out_shape=(jax.ShapeDtypeStruct((npad, d), jnp.float32),
                   jax.ShapeDtypeStruct((npad, dfc), jnp.float32)),
        grid_spec=pltpu.PrefetchScalarGridSpec(
            num_scalar_prefetch=0,
            grid=(npad // tm,),
            in_specs=[
                pl.BlockSpec((tm, npad), lambda i: (i, 0)),
                pl.BlockSpec((npad, k), lambda i: (0, 0)),
                pl.BlockSpec((k, d), lambda i: (0, 0)),
                pl.BlockSpec((1, d), lambda i: (0, 0)),
                pl.BlockSpec((d, dfc), lambda i: (0, 0)),
            ],
            out_specs=[pl.BlockSpec((tm, d), lambda i: (i, 0)),
                       pl.BlockSpec((tm, dfc), lambda i: (i, 0))],
        ),
        compiler_params=_tiled_compiler_params(vmem_cap),
        cost_estimate=cost,
    )(adj_i8, h_bf, w, b, wfc_bf)


# ----------------------------- top-level forward ------------------------------


def gin_forward(x, x_importance, edge_index, params, *, force_tiled=False):
    """Fused GIN forward. Returns [N, 5*dim + out_channels] float32."""
    n, cin = x.shape
    dim = params["w1"].shape[1]
    oc = params["wfc"].shape[1]

    cpad = _round_up(cin, _LANE)
    dpad = _round_up(dim, _LANE)
    ocpad = _round_up(oc, _LANE)
    npad = _round_up(n, _LANE)

    vmem_cap = _vmem_capacity_bytes()

    # --- glue: eval-mode BatchNorm + importance folded as plain XLA, cast to
    #     bf16 ONCE (review: no dedicated elementwise kernel, no per-step cast).
    inv_std = 1.0 / jnp.sqrt(params["bn_var"] + 1e-5)
    scale = params["bn_gamma"] * inv_std
    shift = params["bn_beta"] - params["bn_mean"] * scale
    h0 = (x.astype(jnp.float32) * x_importance.astype(jnp.float32)) * scale + shift
    h0_bf = _pad2(h0, npad, cpad, jnp.bfloat16)

    # --- glue: dense A_hat = A + I built DIRECTLY in bf16 (no f32 (Npad,Npad)
    #     intermediate); edge multiplicities are small integers -> exact.
    src, dst = edge_index[0], edge_index[1]
    adj = jnp.zeros((npad, npad), jnp.bfloat16)
    adj = adj.at[dst, src].add(1.0)
    diag = jnp.arange(n)
    adj = adj.at[diag, diag].add(1.0)

    # --- weights, padded lane-dense (multiples of 128).
    w1 = _pad2(params["w1"], cpad, dpad, jnp.float32)
    ws = jnp.stack([_pad2(params[f"w{k}"], dpad, dpad, jnp.float32)
                    for k in (2, 3, 4, 5)])
    bs = jnp.stack([_pad2(params[f"b{k}"][None, :], 1, dpad, jnp.float32)
                    for k in (1, 2, 3, 4, 5)])
    wfc_bf = _pad2(params["wfc"], dpad, ocpad, jnp.bfloat16)

    # --- choose execution path from the per-generation VMEM budget.
    fused_bytes = (2 * npad * npad                    # resident bf16 A_hat
                   + 2 * npad * cpad                  # bf16 H0
                   + 2 * npad * dpad                  # bf16 H scratch
                   + 4 * npad * (5 * dpad + ocpad)    # f32 outputs
                   + 12 * npad * dpad                 # agg/h temporaries headroom
                   + 4 * (cpad * dpad + 4 * dpad * dpad + 5 * dpad)
                   + 2 * dpad * ocpad)
    use_fused = (not force_tiled) and fused_bytes <= int(vmem_cap * 0.7)

    if use_fused:
        h1, h2, h3, h4, h5, hf = _gin_fused(adj, h0_bf, w1, ws, bs, wfc_bf,
                                            vmem_cap)
        return jnp.concatenate(
            [h1[:n, :dim], h2[:n, :dim], h3[:n, :dim], h4[:n, :dim],
             h5[:n, :dim], hf[:n, :oc]], axis=-1)

    # ------------------ tiled fallback (A_hat does not fit VMEM) -------------
    adj_i8 = adj.astype(jnp.int8)       # compact HBM stream (multiplicity <= 127)

    # TM from the VMEM budget: double-buffered int8 A row tile + outputs/temps
    # per row, on top of the resident bf16 H + weights.
    resident = (2 * npad * max(cpad, dpad)
                + 4 * (cpad + 4 * dpad) * dpad + 2 * dpad * ocpad)
    per_row = 2 * npad + 20 * dpad
    budget = vmem_cap * 3 // 4
    tm = 64
    for cand in (512, 256, 128, 64):
        if npad % cand == 0 and resident + cand * per_row <= budget:
            tm = cand
            break
    tm = min(tm, max(64, npad // 2))    # >= 2 row tiles -> both v7x TensorCores

    outs = []
    h_bf = h0_bf
    for k in range(4):                   # layers 1..4
        w_k = w1 if k == 0 else ws[k - 1]
        h_f, h_bf = _gin_layer(adj_i8, h_bf, w_k, bs[k], tm, vmem_cap)
        outs.append(h_f[:n, :dim])
    h5_f, hf = _gin_last_layer(adj_i8, h_bf, ws[3], bs[4], wfc_bf, tm, vmem_cap)
    outs.append(h5_f[:n, :dim])
    outs.append(hf[:n, :oc])
    return jnp.concatenate(outs, axis=-1)


# ----------------------------- reference & params -----------------------------


def gin_reference(x, x_importance, edge_index, params):
    """Pure-JAX f32 reference mirroring the PyTorch forward (eval mode)."""
    n = x.shape[0]
    src, dst = edge_index[0], edge_index[1]
    adj = jnp.zeros((n, n), jnp.float32).at[dst, src].add(1.0)
    inv_std = 1.0 / jnp.sqrt(params["bn_var"] + 1e-5)
    h = (x * x_importance) * (params["bn_gamma"] * inv_std) + (
        params["bn_beta"] - params["bn_mean"] * params["bn_gamma"] * inv_std)
    outs = []
    for k in (1, 2, 3, 4, 5):
        agg = h + adj @ h
        h = jnp.tanh(agg @ params[f"w{k}"] + params[f"b{k}"])
        outs.append(h)
    outs.append(jnp.tanh(h @ params["wfc"]))
    return jnp.concatenate(outs, axis=-1)


def init_params(key, in_channels, out_channels, dim):
    """Deterministic synthetic parameters (same shapes as the torch module)."""
    keys = jax.random.split(key, 12)

    def lin(k, fan_in, fan_out):
        # weights stored as [fan_in, fan_out] (pre-transposed for x @ W)
        return jax.random.normal(k, (fan_in, fan_out), jnp.float32) * 0.1

    return {
        "bn_gamma": jnp.ones((in_channels,), jnp.float32),
        "bn_beta":  jnp.zeros((in_channels,), jnp.float32),
        "bn_mean":  jnp.zeros((in_channels,), jnp.float32),
        "bn_var":   jnp.ones((in_channels,), jnp.float32),
        "w1": lin(keys[0], in_channels, dim), "b1": jax.random.normal(keys[1], (dim,)) * 0.01,
        "w2": lin(keys[2], dim, dim),         "b2": jax.random.normal(keys[3], (dim,)) * 0.01,
        "w3": lin(keys[4], dim, dim),         "b3": jax.random.normal(keys[5], (dim,)) * 0.01,
        "w4": lin(keys[6], dim, dim),         "b4": jax.random.normal(keys[7], (dim,)) * 0.01,
        "w5": lin(keys[8], dim, dim),         "b5": jax.random.normal(keys[9], (dim,)) * 0.01,
        "wfc": lin(keys[10], dim, out_channels),
    }


if __name__ == "__main__":
    # Small shapes consistent with the module.
    N = 16            # number of graph nodes
    IN_CHANNELS = 8
    DIM = 32
    OUT_CHANNELS = 32
    E = 48            # number of directed edges

    key = jax.random.PRNGKey(0)
    k_x, k_imp, k_src, k_dst, k_params = jax.random.split(key, 5)

    x = jax.random.normal(k_x, (N, IN_CHANNELS), jnp.float32)
    x_importance = jax.random.uniform(k_imp, (N, 1), jnp.float32)
    edge_index = jnp.stack([
        jax.random.randint(k_src, (E,), 0, N),
        jax.random.randint(k_dst, (E,), 0, N),
    ]).astype(jnp.int32)

    params = init_params(k_params, IN_CHANNELS, OUT_CHANNELS, DIM)
    expected_shape = (N, 5 * DIM + OUT_CHANNELS)
    ref = gin_reference(x, x_importance, edge_index, params)

    # Fused (A_hat VMEM-resident) path — default for small/moderate graphs.
    out_fused = jax.block_until_ready(
        jax.jit(gin_forward)(x, x_importance, edge_index, params))
    assert out_fused.shape == expected_shape, (out_fused.shape, expected_shape)
    assert bool(jnp.all(jnp.isfinite(out_fused)))
    err_fused = float(jnp.max(jnp.abs(out_fused - ref)))
    assert err_fused < 1e-1, err_fused

    # Tiled per-layer path (used automatically when A_hat exceeds the VMEM
    # budget; exercised here via force_tiled for coverage).
    out_tiled = jax.block_until_ready(
        jax.jit(functools.partial(gin_forward, force_tiled=True))(
            x, x_importance, edge_index, params))
    assert out_tiled.shape == expected_shape, (out_tiled.shape, expected_shape)
    assert bool(jnp.all(jnp.isfinite(out_tiled)))
    err_tiled = float(jnp.max(jnp.abs(out_tiled - ref)))
    assert err_tiled < 1e-1, err_tiled

    print("KERNEL_OK")
</pallas_src>

<mosaic_0001>
module attributes {stable_mosaic.version = 11 : i64} {
  func.func @_gin_fused_kernel(%arg0: memref<128x128xbf16, #tpu.memory_space<vmem>>, %arg1: memref<128x128xbf16, #tpu.memory_space<vmem>>, %arg2: memref<128x128xf32, #tpu.memory_space<vmem>>, %arg3: memref<4x128x128xf32, #tpu.memory_space<vmem>>, %arg4: memref<5x1x128xf32, #tpu.memory_space<vmem>>, %arg5: memref<128x128xbf16, #tpu.memory_space<vmem>>, %arg6: memref<128x128xf32, #tpu.memory_space<vmem>>, %arg7: memref<128x128xf32, #tpu.memory_space<vmem>>, %arg8: memref<128x128xf32, #tpu.memory_space<vmem>>, %arg9: memref<128x128xf32, #tpu.memory_space<vmem>>, %arg10: memref<128x128xf32, #tpu.memory_space<vmem>>, %arg11: memref<128x128xf32, #tpu.memory_space<vmem>>, %arg12: memref<128x128xbf16, #tpu.memory_space<vmem>>) attributes {dimension_semantics = [], scalar_prefetch = 0 : i64, scratch_operands = 1 : i64, tpu.core_type = #tpu.core_type<tc>} {
    %c0 = arith.constant 0 : index
    %c0_0 = arith.constant 0 : index
    %0 = vector.load %arg0[%c0, %c0_0] : memref<128x128xbf16, #tpu.memory_space<vmem>>, vector<128x128xbf16>
    %c0_1 = arith.constant 0 : index
    %c0_2 = arith.constant 0 : index
    %1 = vector.load %arg1[%c0_1, %c0_2] : memref<128x128xbf16, #tpu.memory_space<vmem>>, vector<128x128xbf16>
    %cst = arith.constant dense<0.000000e+00> : vector<128x128xf32>
    %2 = tpu.matmul %0, %1, %cst {dimension_numbers = #tpu.dot_dimension_numbers<[1], [0], [0], [1], [0, 0, 1, 1], [], []>} : vector<128x128xbf16>, vector<128x128xbf16>, vector<128x128xf32> -> vector<128x128xf32>
    %c0_3 = arith.constant 0 : index
    %c0_4 = arith.constant 0 : index
    %3 = vector.load %arg2[%c0_3, %c0_4] : memref<128x128xf32, #tpu.memory_space<vmem>>, vector<128x128xf32>
    %cst_5 = arith.constant dense<0.000000e+00> : vector<128x128xf32>
    %4 = tpu.matmul %2, %3, %cst_5 {dimension_numbers = #tpu.dot_dimension_numbers<[1], [0], [0], [1], [0, 0, 1, 1], [], []>} : vector<128x128xf32>, vector<128x128xf32>, vector<128x128xf32> -> vector<128x128xf32>
    %c0_6 = arith.constant 0 : index
    %c0_7 = arith.constant 0 : index
    %c0_8 = arith.constant 0 : index
    %5 = vector.load %arg4[%c0_6, %c0_7, %c0_8] : memref<5x1x128xf32, #tpu.memory_space<vmem>>, vector<1x1x128xf32>
    %6 = vector.shape_cast %5 : vector<1x1x128xf32> to vector<1x128xf32>
    %7 = vector.broadcast %6 : vector<1x128xf32> to vector<128x128xf32>
    %8 = arith.addf %4, %7 : vector<128x128xf32>
    %9 = math.tanh %8 : vector<128x128xf32>
    %c0_9 = arith.constant 0 : index
    %c0_10 = arith.constant 0 : index
    %10 = vector.load %arg6[%c0_9, %c0_10] : memref<128x128xf32, #tpu.memory_space<vmem>>, vector<128x128xf32>
    tpu.vector_store %arg6[%c0_9, %c0_10], %9 {strides = array<i32>} : memref<128x128xf32, #tpu.memory_space<vmem>>, vector<128x128xf32>,
    %11 = arith.truncf %9 : vector<128x128xf32> to vector<128x128xbf16>
    %c0_11 = arith.constant 0 : index
    %c0_12 = arith.constant 0 : index
    %12 = vector.load %arg12[%c0_11, %c0_12] : memref<128x128xbf16, #tpu.memory_space<vmem>>, vector<128x128xbf16>
    tpu.vector_store %arg12[%c0_11, %c0_12], %11 {strides = array<i32>} : memref<128x128xbf16, #tpu.memory_space<vmem>>, vector<128x128xbf16>,
    %c0_13 = arith.constant 0 : index
    %c0_14 = arith.constant 0 : index
    %13 = vector.load %arg12[%c0_13, %c0_14] : memref<128x128xbf16, #tpu.memory_space<vmem>>, vector<128x128xbf16>
    %cst_15 = arith.constant dense<0.000000e+00> : vector<128x128xf32>
    %14 = tpu.matmul %0, %13, %cst_15 {dimension_numbers = #tpu.dot_dimension_numbers<[1], [0], [0], [1], [0, 0, 1, 1], [], []>} : vector<128x128xbf16>, vector<128x128xbf16>, vector<128x128xf32> -> vector<128x128xf32>
    %c0_16 = arith.constant 0 : index
    %c0_17 = arith.constant 0 : index
    %c0_18 = arith.constant 0 : index
    %15 = vector.load %arg3[%c0_16, %c0_17, %c0_18] : memref<4x128x128xf32, #tpu.memory_space<vmem>>, vector<1x128x128xf32>
    %16 = vector.shape_cast %15 : vector<1x128x128xf32> to vector<128x128xf32>
    %cst_19 = arith.constant dense<0.000000e+00> : vector<128x128xf32>
    %17 = tpu.matmul %14, %16, %cst_19 {dimension_numbers = #tpu.dot_dimension_numbers<[1], [0], [0], [1], [0, 0, 1, 1], [], []>} : vector<128x128xf32>, vector<128x128xf32>, vector<128x128xf32> -> vector<128x128xf32>
    %c1 = arith.constant 1 : index
    %c0_20 = arith.constant 0 : index
    %c0_21 = arith.constant 0 : index
    %18 = vector.load %arg4[%c1, %c0_20, %c0_21] : memref<5x1x128xf32, #tpu.memory_space<vmem>>, vector<1x1x128xf32>
    %19 = vector.shape_cast %18 : vector<1x1x128xf32> to vector<1x128xf32>
    %20 = vector.broadcast %19 : vector<1x128xf32> to vector<128x128xf32>
    %21 = arith.addf %17, %20 : vector<128x128xf32>
    %22 = math.tanh %21 : vector<128x128xf32>
    %c0_22 = arith.constant 0 : index
    %c0_23 = arith.constant 0 : index
    %23 = vector.load %arg7[%c0_22, %c0_23] : memref<128x128xf32, #tpu.memory_space<vmem>>, vector<128x128xf32>
    tpu.vector_store %arg7[%c0_22, %c0_23], %22 {strides = array<i32>} : memref<128x128xf32, #tpu.memory_space<vmem>>, vector<128x128xf32>,
    %24 = arith.truncf %22 : vector<128x128xf32> to vector<128x128xbf16>
    %c0_24 = arith.constant 0 : index
    %c0_25 = arith.constant 0 : index
    %25 = vector.load %arg12[%c0_24, %c0_25] : memref<128x128xbf16, #tpu.memory_space<vmem>>, vector<128x128xbf16>
    tpu.vector_store %arg12[%c0_24, %c0_25], %24 {strides = array<i32>} : memref<128x128xbf16, #tpu.memory_space<vmem>>, vector<128x128xbf16>,
    %c0_26 = arith.constant 0 : index
    %c0_27 = arith.constant 0 : index
    %26 = vector.load %arg12[%c0_26, %c0_27] : memref<128x128xbf16, #tpu.memory_space<vmem>>, vector<128x128xbf16>
    %cst_28 = arith.constant dense<0.000000e+00> : vector<128x128xf32>
    %27 = tpu.matmul %0, %26, %cst_28 {dimension_numbers = #tpu.dot_dimension_numbers<[1], [0], [0], [1], [0, 0, 1, 1], [], []>} : vector<128x128xbf16>, vector<128x128xbf16>, vector<128x128xf32> -> vector<128x128xf32>
    %c1_29 = arith.constant 1 : index
    %c0_30 = arith.constant 0 : index
    %c0_31 = arith.constant 0 : index
    %28 = vector.load %arg3[%c1_29, %c0_30, %c0_31] : memref<4x128x128xf32, #tpu.memory_space<vmem>>, vector<1x128x128xf32>
    %29 = vector.shape_cast %28 : vector<1x128x128xf32> to vector<128x128xf32>
    %cst_32 = arith.constant dense<0.000000e+00> : vector<128x128xf32>
    %30 = tpu.matmul %27, %29, %cst_32 {dimension_numbers = #tpu.dot_dimension_numbers<[1], [0], [0], [1], [0, 0, 1, 1], [], []>} : vector<128x128xf32>, vector<128x128xf32>, vector<128x128xf32> -> vector<128x128xf32>
    %c2 = arith.constant 2 : index
    %c0_33 = arith.constant 0 : index
    %c0_34 = arith.constant 0 : index
    %31 = vector.load %arg4[%c2, %c0_33, %c0_34] : memref<5x1x128xf32, #tpu.memory_space<vmem>>, vector<1x1x128xf32>
    %32 = vector.shape_cast %31 : vector<1x1x128xf32> to vector<1x128xf32>
    %33 = vector.broadcast %32 : vector<1x128xf32> to vector<128x128xf32>
    %34 = arith.addf %30, %33 : vector<128x128xf32>
    %35 = math.tanh %34 : vector<128x128xf32>
    %c0_35 = arith.constant 0 : index
    %c0_36 = arith.constant 0 : index
    %36 = vector.load %arg8[%c0_35, %c0_36] : memref<128x128xf32, #tpu.memory_space<vmem>>, vector<128x128xf32>
    tpu.vector_store %arg8[%c0_35, %c0_36], %35 {strides = array<i32>} : memref<128x128xf32, #tpu.memory_space<vmem>>, vector<128x128xf32>,
    %37 = arith.truncf %35 : vector<128x128xf32> to vector<128x128xbf16>
    %c0_37 = arith.constant 0 : index
    %c0_38 = arith.constant 0 : index
    %38 = vector.load %arg12[%c0_37, %c0_38] : memref<128x128xbf16, #tpu.memory_space<vmem>>, vector<128x128xbf16>
    tpu.vector_store %arg12[%c0_37, %c0_38], %37 {strides = array<i32>} : memref<128x128xbf16, #tpu.memory_space<vmem>>, vector<128x128xbf16>,
    %c0_39 = arith.constant 0 : index
    %c0_40 = arith.constant 0 : index
    %39 = vector.load %arg12[%c0_39, %c0_40] : memref<128x128xbf16, #tpu.memory_space<vmem>>, vector<128x128xbf16>
    %cst_41 = arith.constant dense<0.000000e+00> : vector<128x128xf32>
    %40 = tpu.matmul %0, %39, %cst_41 {dimension_numbers = #tpu.dot_dimension_numbers<[1], [0], [0], [1], [0, 0, 1, 1], [], []>} : vector<128x128xbf16>, vector<128x128xbf16>, vector<128x128xf32> -> vector<128x128xf32>
    %c2_42 = arith.constant 2 : index
    %c0_43 = arith.constant 0 : index
    %c0_44 = arith.constant 0 : index
    %41 = vector.load %arg3[%c2_42, %c0_43, %c0_44] : memref<4x128x128xf32, #tpu.memory_space<vmem>>, vector<1x128x128xf32>
    %42 = vector.shape_cast %41 : vector<1x128x128xf32> to vector<128x128xf32>
    %cst_45 = arith.constant dense<0.000000e+00> : vector<128x128xf32>
    %43 = tpu.matmul %40, %42, %cst_45 {dimension_numbers = #tpu.dot_dimension_numbers<[1], [0], [0], [1], [0, 0, 1, 1], [], []>} : vector<128x128xf32>, vector<128x128xf32>, vector<128x128xf32> -> vector<128x128xf32>
    %c3 = arith.constant 3 : index
    %c0_46 = arith.constant 0 : index
    %c0_47 = arith.constant 0 : index
    %44 = vector.load %arg4[%c3, %c0_46, %c0_47] : memref<5x1x128xf32, #tpu.memory_space<vmem>>, vector<1x1x128xf32>
    %45 = vector.shape_cast %44 : vector<1x1x128xf32> to vector<1x128xf32>
    %46 = vector.broadcast %45 : vector<1x128xf32> to vector<128x128xf32>
    %47 = arith.addf %43, %46 : vector<128x128xf32>
    %48 = math.tanh %47 : vector<128x128xf32>
    %c0_48 = arith.constant 0 : index
    %c0_49 = arith.constant 0 : index
    %49 = vector.load %arg9[%c0_48, %c0_49] : memref<128x128xf32, #tpu.memory_space<vmem>>, vector<128x128xf32>
    tpu.vector_store %arg9[%c0_48, %c0_49], %48 {strides = array<i32>} : memref<128x128xf32, #tpu.memory_space<vmem>>, vector<128x128xf32>,
    %50 = arith.truncf %48 : vector<128x128xf32> to vector<128x128xbf16>
    %c0_50 = arith.constant 0 : index
    %c0_51 = arith.constant 0 : index
    %51 = vector.load %arg12[%c0_50, %c0_51] : memref<128x128xbf16, #tpu.memory_space<vmem>>, vector<128x128xbf16>
    tpu.vector_store %arg12[%c0_50, %c0_51], %50 {strides = array<i32>} : memref<128x128xbf16, #tpu.memory_space<vmem>>, vector<128x128xbf16>,
    %c0_52 = arith.constant 0 : index
    %c0_53 = arith.constant 0 : index
    %52 = vector.load %arg12[%c0_52, %c0_53] : memref<128x128xbf16, #tpu.memory_space<vmem>>, vector<128x128xbf16>
    %cst_54 = arith.constant dense<0.000000e+00> : vector<128x128xf32>
    %53 = tpu.matmul %0, %52, %cst_54 {dimension_numbers = #tpu.dot_dimension_numbers<[1], [0], [0], [1], [0, 0, 1, 1], [], []>} : vector<128x128xbf16>, vector<128x128xbf16>, vector<128x128xf32> -> vector<128x128xf32>
    %c3_55 = arith.constant 3 : index
    %c0_56 = arith.constant 0 : index
    %c0_57 = arith.constant 0 : index
    %54 = vector.load %arg3[%c3_55, %c0_56, %c0_57] : memref<4x128x128xf32, #tpu.memory_space<vmem>>, vector<1x128x128xf32>
    %55 = vector.shape_cast %54 : vector<1x128x128xf32> to vector<128x128xf32>
    %cst_58 = arith.constant dense<0.000000e+00> : vector<128x128xf32>
    %56 = tpu.matmul %53, %55, %cst_58 {dimension_numbers = #tpu.dot_dimension_numbers<[1], [0], [0], [1], [0, 0, 1, 1], [], []>} : vector<128x128xf32>, vector<128x128xf32>, vector<128x128xf32> -> vector<128x128xf32>
    %c4 = arith.constant 4 : index
    %c0_59 = arith.constant 0 : index
    %c0_60 = arith.constant 0 : index
    %57 = vector.load %arg4[%c4, %c0_59, %c0_60] : memref<5x1x128xf32, #tpu.memory_space<vmem>>, vector<1x1x128xf32>
    %58 = vector.shape_cast %57 : vector<1x1x128xf32> to vector<1x128xf32>
    %59 = vector.broadcast %58 : vector<1x128xf32> to vector<128x128xf32>
    %60 = arith.addf %56, %59 : vector<128x128xf32>
    %61 = math.tanh %60 : vector<128x128xf32>
    %c0_61 = arith.constant 0 : index
    %c0_62 = arith.constant 0 : index
    %62 = vector.load %arg10[%c0_61, %c0_62] : memref<128x128xf32, #tpu.memory_space<vmem>>, vector<128x128xf32>
    tpu.vector_store %arg10[%c0_61, %c0_62], %61 {strides = array<i32>} : memref<128x128xf32, #tpu.memory_space<vmem>>, vector<128x128xf32>,
    %63 = arith.truncf %61 : vector<128x128xf32> to vector<128x128xbf16>
    %c0_63 = arith.constant 0 : index
    %c0_64 = arith.constant 0 : index
    %64 = vector.load %arg12[%c0_63, %c0_64] : memref<128x128xbf16, #tpu.memory_space<vmem>>, vector<128x128xbf16>
    tpu.vector_store %arg12[%c0_63, %c0_64], %63 {strides = array<i32>} : memref<128x128xbf16, #tpu.memory_space<vmem>>, vector<128x128xbf16>,
    %c0_65 = arith.constant 0 : index
    %c0_66 = arith.constant 0 : index
    %65 = vector.load %arg12[%c0_65, %c0_66] : memref<128x128xbf16, #tpu.memory_space<vmem>>, vector<128x128xbf16>
    %c0_67 = arith.constant 0 : index
    %c0_68 = arith.constant 0 : index
    %66 = vector.load %arg5[%c0_67, %c0_68] : memref<128x128xbf16, #tpu.memory_space<vmem>>, vector<128x128xbf16>
    %cst_69 = arith.constant dense<0.000000e+00> : vector<128x128xf32>
    %67 = tpu.matmul %65, %66, %cst_69 {dimension_numbers = #tpu.dot_dimension_numbers<[1], [0], [0], [1], [0, 0, 1, 1], [], []>} : vector<128x128xbf16>, vector<128x128xbf16>, vector<128x128xf32> -> vector<128x128xf32>
    %68 = math.tanh %67 : vector<128x128xf32>
    %c0_70 = arith.constant 0 : index
    %c0_71 = arith.constant 0 : index
    %69 = vector.load %arg11[%c0_70, %c0_71] : memref<128x128xf32, #tpu.memory_space<vmem>>, vector<128x128xf32>
    tpu.vector_store %arg11[%c0_70, %c0_71], %68 {strides = array<i32>} : memref<128x128xf32, #tpu.memory_space<vmem>>, vector<128x128xf32>,
    return
  }
}

</mosaic_0001>

<llo_original>
// kernel: gin_forward.1
$region0: #{gin_forward.1}
  #allocation0 [shape = 'u32[]', space=smem, size = 0x4, offset = 0x4, fixed_abs, tag = 'smem constant byte address 0x4 - core index']
  #allocation1 [shape = 'u32[144,128]{1,0:T(1,128)}', space=vmem, size = 0x12000, scoped, tag = 'internal scratch']
  #allocation2 [shape = 'bf16[128,128]{1,0:T(16,128)(2,1)}', space=vmem, size = 0x8000, scoped, tag = 'scratch operand']
  %s0 = inlined_call_operand.vmem [shape: bf16[128,128], index: 0, kind: input, shape index: {}]
  %s1 = inlined_call_operand.vmem [shape: bf16[128,128], index: 1, kind: input, shape index: {}]
  %s2 = inlined_call_operand.vmem [shape: f32[128,128], index: 2, kind: input, shape index: {}]
  %s3 = inlined_call_operand.vmem [shape: f32[4,128,128], index: 3, kind: input, shape index: {}]
  %s4 = inlined_call_operand.vmem [shape: f32[5,1,128], index: 4, kind: input, shape index: {}]
  %s5 = inlined_call_operand.vmem [shape: bf16[128,128], index: 5, kind: input, shape index: {}]
  %s6 = inlined_call_operand.vmem [shape: f32[128,128], index: 6, kind: output, shape index: {0}]
  %s7 = inlined_call_operand.vmem [shape: f32[128,128], index: 7, kind: output, shape index: {1}]
  %s8 = inlined_call_operand.vmem [shape: f32[128,128], index: 8, kind: output, shape index: {2}]
  %s9 = inlined_call_operand.vmem [shape: f32[128,128], index: 9, kind: output, shape index: {3}]
  %s10 = inlined_call_operand.vmem [shape: f32[128,128], index: 10, kind: output, shape index: {4}]
  %s11 = inlined_call_operand.vmem [shape: f32[128,128], index: 11, kind: output, shape index: {5}]
  %12 = xla_tuple %s6, %s7, %s8, %s9, %s10, %s11
  %s13 = sld [smem:[#allocation0]]
  $region74: #{gin_forward.1} parent=0
    _
  %s15 = ssub.s32 1, %s13
  %s16 = scalar_select 0, %s15, %s13
  // Predicated region
  $region2: #{gin_forward.1} parent=0 // pred_check
    _
  $region3: #{gin_forward.1} parent=0 // pred_check_branch
    %18 = sbr.rel (0) target = $region5
  $region4: #{gin_forward.1} parent=0 // pred_region
    _
  $region5: #{gin_forward.1} parent=0 // pred_fallthru
    _
  // Predicated region
  $region6: #{gin_forward.1} parent=0 // pred_check
    _
  $region7: #{gin_forward.1} parent=0 // pred_check_branch
    %20 = sbr.rel (0) target = $region9
  $region8: #{gin_forward.1} parent=0 // pred_region
    _
  $region9: #{gin_forward.1} parent=0 // pred_fallthru
    _
  // Predicated region
  $region10: #{gin_forward.1} parent=0 // pred_check
    _
  $region11: #{gin_forward.1} parent=0 // pred_check_branch
    %22 = sbr.rel (0) target = $region13
  $region12: #{gin_forward.1} parent=0 // pred_region
    _
  $region13: #{gin_forward.1} parent=0 // pred_fallthru
    _
  // Predicated region
  $region14: #{gin_forward.1} parent=0 // pred_check
    _
  $region15: #{gin_forward.1} parent=0 // pred_check_branch
    %24 = sbr.rel (0) target = $region17
  $region16: #{gin_forward.1} parent=0 // pred_region
    _
  $region17: #{gin_forward.1} parent=0 // pred_fallthru
    _
  // Predicated region
  $region18: #{gin_forward.1} parent=0 // pred_check
    _
  $region19: #{gin_forward.1} parent=0 // pred_check_branch
    %26 = sbr.rel (0) target = $region21
  $region20: #{gin_forward.1} parent=0 // pred_region
    _
  $region21: #{gin_forward.1} parent=0 // pred_fallthru
    _
  // Predicated region
  $region22: #{gin_forward.1} parent=0 // pred_check
    _
  $region23: #{gin_forward.1} parent=0 // pred_check_branch
    %28 = sbr.rel (0) target = $region25
  $region24: #{gin_forward.1} parent=0 // pred_region
    _
  $region25: #{gin_forward.1} parent=0 // pred_fallthru
    _
  %v30 = vld [vmem:[%s0] sm:$0xf]
  %v31 = vld [vmem:[%s0 + $0x4] sm:$0xf]
  %v32 = vld [vmem:[%s0 + $0x8] sm:$0xf]
  %v33 = vld [vmem:[%s0 + $0xc] sm:$0xf]
  %v34 = vld [vmem:[%s0 + $0x10] sm:$0xf]
  %v35 = vld [vmem:[%s0 + $0x14] sm:$0xf]
  %v36 = vld [vmem:[%s0 + $0x18] sm:$0xf]
  %v37 = vld [vmem:[%s0 + $0x1c] sm:$0xf]
  %v38 = vld [vmem:[%s0 + $0x20] sm:$0xf]
  %v39 = vld [vmem:[%s0 + $0x24] sm:$0xf]
  %v40 = vld [vmem:[%s0 + $0x28] sm:$0xf]
  %v41 = vld [vmem:[%s0 + $0x2c] sm:$0xf]
  %v42 = vld [vmem:[%s0 + $0x30] sm:$0xf]
  %v43 = vld [vmem:[%s0 + $0x34] sm:$0xf]
  %v44 = vld [vmem:[%s0 + $0x38] sm:$0xf]
  %v45 = vld [vmem:[%s0 + $0x3c] sm:$0xf]
  %v46 = vld [vmem:[%s1] sm:$0xf]
  %v47 = vld [vmem:[%s1 + $0x4] sm:$0xf]
  %v48 = vld [vmem:[%s1 + $0x8] sm:$0xf]
  %v49 = vld [vmem:[%s1 + $0xc] sm:$0xf]
  %v50 = vld [vmem:[%s1 + $0x10] sm:$0xf]
  %v51 = vld [vmem:[%s1 + $0x14] sm:$0xf]
  %v52 = vld [vmem:[%s1 + $0x18] sm:$0xf]
  %v53 = vld [vmem:[%s1 + $0x1c] sm:$0xf]
  %v54 = vld [vmem:[%s1 + $0x20] sm:$0xf]
  %v55 = vld [vmem:[%s1 + $0x24] sm:$0xf]
  %v56 = vld [vmem:[%s1 + $0x28] sm:$0xf]
  %v57 = vld [vmem:[%s1 + $0x2c] sm:$0xf]
  %v58 = vld [vmem:[%s1 + $0x30] sm:$0xf]
  %v59 = vld [vmem:[%s1 + $0x34] sm:$0xf]
  %v60 = vld [vmem:[%s1 + $0x38] sm:$0xf]
  %v61 = vld [vmem:[%s1 + $0x3c] sm:$0xf]
  %v78 = vunpack.c.l.b16 %v30
  %v79 = vunpack.c.l.b16 %v31
  %v80 = vunpack.c.l.b16 %v32
  %v81 = vunpack.c.l.b16 %v33
  %v82 = vunpack.c.l.b16 %v34
  %v83 = vunpack.c.l.b16 %v35
  %v84 = vunpack.c.l.b16 %v36
  %v85 = vunpack.c.l.b16 %v37
  %v86 = vunpack.c.l.b16 %v38
  %v87 = vunpack.c.l.b16 %v39
  %v88 = vunpack.c.l.b16 %v40
  %v89 = vunpack.c.l.b16 %v41
  %v90 = vunpack.c.l.b16 %v42
  %v91 = vunpack.c.l.b16 %v43
  %v92 = vunpack.c.l.b16 %v44
  %v93 = vunpack.c.l.b16 %v45
  %v94 = vpack.c.b16 %v79, %v78
  %v95 = vpack.c.b16 %v81, %v80
  %v96 = vpack.c.b16 %v83, %v82
  %v97 = vpack.c.b16 %v85, %v84
  %v98 = vpack.c.b16 %v87, %v86
  %v99 = vpack.c.b16 %v89, %v88
  %v100 = vpack.c.b16 %v91, %v90
  %v101 = vpack.c.b16 %v93, %v92
  %v126 = vunpack.c.l.b16 %v46
  %v127 = vunpack.c.l.b16 %v47
  %v128 = vunpack.c.l.b16 %v48
  %v129 = vunpack.c.l.b16 %v49
  %v130 = vunpack.c.l.b16 %v50
  %v131 = vunpack.c.l.b16 %v51
  %v132 = vunpack.c.l.b16 %v52
  %v133 = vunpack.c.l.b16 %v53
  %v134 = vunpack.c.l.b16 %v54
  %v135 = vunpack.c.l.b16 %v55
  %v136 = vunpack.c.l.b16 %v56
  %v137 = vunpack.c.l.b16 %v57
  %v138 = vunpack.c.l.b16 %v58
  %v139 = vunpack.c.l.b16 %v59
  %v140 = vunpack.c.l.b16 %v60
  %v141 = vunpack.c.l.b16 %v61
  %v142 = vpack.c.b16 %v127, %v126
  %v143 = vpack.c.b16 %v129, %v128
  %v144 = vpack.c.b16 %v131, %v130
  %v145 = vpack.c.b16 %v133, %v132
  %v146 = vpack.c.b16 %v135, %v134
  %v147 = vpack.c.b16 %v137, %v136
  %v148 = vpack.c.b16 %v139, %v138
  %v149 = vpack.c.b16 %v141, %v140
  %158 = vmatprep.subr.bf16.mxu0 0
  %159 = vmatpush1.bf16.msra.mxu0 %v142
  %160 = vmatprep.subr.bf16.mxu0 0
  %161 = vmatpush1.bf16.msra.mxu0 %v143
  %162 = vmatprep.subr.bf16.mxu0 0
  %163 = vmatpush1.bf16.msra.mxu0 %v144
  %164 = vmatprep.subr.bf16.mxu0 0
  %165 = vmatpush1.bf16.msra.mxu0 %v145
  %166 = vmatprep.subr.bf16.mxu0 0
  %167 = vmatpush1.bf16.msra.mxu0 %v146
  %168 = vmatprep.subr.bf16.mxu0 0
  %169 = vmatpush1.bf16.msra.mxu0 %v147
  %170 = vmatprep.subr.bf16.mxu0 0
  %171 = vmatpush1.bf16.msra.mxu0 %v148
  %172 = vmatprep.subr.bf16.mxu0 0
  %173 = vmatpush1.bf16.msra.mxu0 %v149
  %174 = vmatprep.subr.bf16.mxu0 0
  %175 = vmatpush1.bf16.msra.mxu0 0
  %176 = vmatprep.subr.bf16.mxu0 0
  %177 = vmatpush1.bf16.msra.mxu0 0
  %178 = vmatprep.subr.bf16.mxu0 0
  %179 = vmatpush1.bf16.msra.mxu0 0
  %180 = vmatprep.subr.bf16.mxu0 0
  %181 = vmatpush1.bf16.msra.mxu0 0
  %182 = vmatprep.subr.bf16.mxu0 0
  %183 = vmatpush1.bf16.msra.mxu0 0
  %184 = vmatprep.subr.bf16.mxu0 0
  %185 = vmatpush1.bf16.msra.mxu0 0
  %186 = vmatprep.subr.bf16.mxu0 0
  %187 = vmatpush1.bf16.msra.mxu0 0
  %188 = vmatprep.subr.bf16.mxu0 0
  %189 = vmatpush1.bf16.msra.mxu0 0
  %190 = vmatprep.mubr.bf16.mxu0 0
  %191 = vmatmul.mubr.bf16.gmra.mrb[0].mxu0 %v94
  %v192 = vpop.f32.mrb[0].mxu0
  %v193 = vadd.f32 0.0, %v192
  %v194 = vpop.f32.mrb[0].mxu0
  %v195 = vpop.f32.mrb[0].mxu0
  %v196 = vadd.f32 0.0, %v195
  %v197 = vpop.f32.mrb[0].mxu0
  %198 = vmatprep.mubr.bf16.mxu0 0
  %199 = vmatmul.mubr.bf16.gmra.mrb[0].mxu0 %v95
  %v200 = vpop.f32.mrb[0].mxu0
  %v201 = vadd.f32 0.0, %v200
  %v202 = vpop.f32.mrb[0].mxu0
  %v203 = vpop.f32.mrb[0].mxu0
  %v204 = vadd.f32 0.0, %v203
  %v205 = vpop.f32.mrb[0].mxu0
  %206 = vmatprep.mubr.bf16.mxu0 0
  %207 = vmatmul.mubr.bf16.gmra.mrb[0].mxu0 %v96
  %v208 = vpop.f32.mrb[0].mxu0
  %v209 = vadd.f32 0.0, %v208
  %v210 = vpop.f32.mrb[0].mxu0
  %v211 = vpop.f32.mrb[0].mxu0
  %v212 = vadd.f32 0.0, %v211
  %v213 = vpop.f32.mrb[0].mxu0
  %214 = vmatprep.mubr.bf16.mxu0 0
  %215 = vmatmul.mubr.bf16.gmra.mrb[0].mxu0 %v97
  %v216 = vpop.f32.mrb[0].mxu0
  %v217 = vadd.f32 0.0, %v216
  %v218 = vpop.f32.mrb[0].mxu0
  %v219 = vpop.f32.mrb[0].mxu0
  %v220 = vadd.f32 0.0, %v219
  %v221 = vpop.f32.mrb[0].mxu0
  %222 = vmatprep.mubr.bf16.mxu0 0
  %223 = vmatmul.mubr.bf16.gmra.mrb[0].mxu0 %v98
  %v224 = vpop.f32.mrb[0].mxu0
  %v225 = vadd.f32 0.0, %v224
  %v226 = vpop.f32.mrb[0].mxu0
  %v227 = vpop.f32.mrb[0].mxu0
  %v228 = vadd.f32 0.0, %v227
  %v229 = vpop.f32.mrb[0].mxu0
  %230 = vmatprep.mubr.bf16.mxu0 0
  %231 = vmatmul.mubr.bf16.gmra.mrb[0].mxu0 %v99
  %v232 = vpop.f32.mrb[0].mxu0
  %v233 = vadd.f32 0.0, %v232
  %v234 = vpop.f32.mrb[0].mxu0
  %v235 = vpop.f32.mrb[0].mxu0
  %v236 = vadd.f32 0.0, %v235
  %v237 = vpop.f32.mrb[0].mxu0
  %238 = vmatprep.mubr.bf16.mxu0 0
  %239 = vmatmul.mubr.bf16.gmra.mrb[0].mxu0 %v100
  %v240 = vpop.f32.mrb[0].mxu0
  %v241 = vadd.f32 0.0, %v240
  %v242 = vpop.f32.mrb[0].mxu0
  %v243 = vpop.f32.mrb[0].mxu0
  %v244 = vadd.f32 0.0, %v243
  %v245 = vpop.f32.mrb[0].mxu0
  %246 = vmatprep.mubr.bf16.mxu0 0
  %247 = vmatmul.mubr.bf16.gmra.mrb[0].mxu0 %v101
  %v248 = vpop.f32.mrb[0].mxu0
  %v249 = vadd.f32 0.0, %v248
  %v250 = vpop.f32.mrb[0].mxu0
  %v251 = vpop.f32.mrb[0].mxu0
  %v252 = vadd.f32 0.0, %v251
  %v253 = vpop.f32.mrb[0].mxu0
  %254 = vdwg.mxu0
  %v255 = vld [vmem:[%s2] sm:$0xff]
  %v256 = vld [vmem:[%s2 + $0x8] sm:$0xff]
  %v257 = vld [vmem:[%s2 + $0x10] sm:$0xff]
  %v258 = vld [vmem:[%s2 + $0x18] sm:$0xff]
  %v259 = vld [vmem:[%s2 + $0x20] sm:$0xff]
  %v260 = vld [vmem:[%s2 + $0x28] sm:$0xff]
  %v261 = vld [vmem:[%s2 + $0x30] sm:$0xff]
  %v262 = vld [vmem:[%s2 + $0x38] sm:$0xff]
  %v263 = vld [vmem:[%s2 + $0x40] sm:$0xff]
  %v264 = vld [vmem:[%s2 + $0x48] sm:$0xff]
  %v265 = vld [vmem:[%s2 + $0x50] sm:$0xff]
  %v266 = vld [vmem:[%s2 + $0x58] sm:$0xff]
  %v267 = vld [vmem:[%s2 + $0x60] sm:$0xff]
  %v268 = vld [vmem:[%s2 + $0x68] sm:$0xff]
  %v269 = vld [vmem:[%s2 + $0x70] sm:$0xff]
  %v270 = vld [vmem:[%s2 + $0x78] sm:$0xff]
  %v271 = vld [vmem:[%s4] sm:$0x1]
  %v273 = vlaneseq
  %v274 = vshrl.u32 %v273, 7
  %v275 = vsub.s32 0, %v274
  %v276 = vrot.slane %v271, %v275
  %278 = vmatprep.subr.mxu0 0.0
  %279 = vmatpush1.msra.mxu0 %v255
  %280 = vmatprep.subr.mxu0 0.0
  %281 = vmatpush1.msra.mxu0 %v256
  %282 = vmatprep.subr.mxu0 0.0
  %283 = vmatpush1.msra.mxu0 %v257
  %284 = vmatprep.subr.mxu0 0.0
  %285 = vmatpush1.msra.mxu0 %v258
  %286 = vmatprep.subr.mxu0 0.0
  %287 = vmatpush1.msra.mxu0 %v259
  %288 = vmatprep.subr.mxu0 0.0
  %289 = vmatpush1.msra.mxu0 %v260
  %290 = vmatprep.subr.mxu0 0.0
  %291 = vmatpush1.msra.mxu0 %v261
  %292 = vmatprep.subr.mxu0 0.0
  %293 = vmatpush1.msra.mxu0 %v262
  %294 = vmatprep.subr.mxu0 0.0
  %295 = vmatpush1.msra.mxu0 %v263
  %296 = vmatprep.subr.mxu0 0.0
  %297 = vmatpush1.msra.mxu0 %v264
  %298 = vmatprep.subr.mxu0 0.0
  %299 = vmatpush1.msra.mxu0 %v265
  %300 = vmatprep.subr.mxu0 0.0
  %301 = vmatpush1.msra.mxu0 %v266
  %302 = vmatprep.subr.mxu0 0.0
  %303 = vmatpush1.msra.mxu0 %v267
  %304 = vmatprep.subr.mxu0 0.0
  %305 = vmatpush1.msra.mxu0 %v268
  %306 = vmatprep.subr.mxu0 0.0
  %307 = vmatpush1.msra.mxu0 %v269
  %308 = vmatprep.subr.mxu0 0.0
  %309 = vmatpush1.msra.mxu0 %v270
  %310 = vmatprep.subr.mxu0 0.0
  %311 = vmatpush1.msra.mxu0 0.0
  %312 = vmatprep.subr.mxu0 0.0
  %313 = vmatpush1.msra.mxu0 0.0
  %314 = vmatprep.subr.mxu0 0.0
  %315 = vmatpush1.msra.mxu0 0.0
  %316 = vmatprep.subr.mxu0 0.0
  %317 = vmatpush1.msra.mxu0 0.0
  %318 = vmatprep.subr.mxu0 0.0
  %319 = vmatpush1.msra.mxu0 0.0
  %320 = vmatprep.subr.mxu0 0.0
  %321 = vmatpush1.msra.mxu0 0.0
  %322 = vmatprep.subr.mxu0 0.0
  %323 = vmatpush1.msra.mxu0 0.0
  %324 = vmatprep.subr.mxu0 0.0
  %325 = vmatpush1.msra.mxu0 0.0
  %326 = vmatprep.subr.mxu0 0.0
  %327 = vmatpush1.msra.mxu0 0.0
  %328 = vmatprep.subr.mxu0 0.0
  %329 = vmatpush1.msra.mxu0 0.0
  %330 = vmatprep.subr.mxu0 0.0
  %331 = vmatpush1.msra.mxu0 0.0
  %332 = vmatprep.subr.mxu0 0.0
  %333 = vmatpush1.msra.mxu0 0.0
  %334 = vmatprep.subr.mxu0 0.0
  %335 = vmatpush1.msra.mxu0 0.0
  %336 = vmatprep.subr.mxu0 0.0
  %337 = vmatpush1.msra.mxu0 0.0
  %338 = vmatprep.subr.mxu0 0.0
  %339 = vmatpush1.msra.mxu0 0.0
  %340 = vmatprep.subr.mxu0 0.0
  %341 = vmatpush1.msra.mxu0 0.0
  %342 = vmatprep.mubr.f32.mxu0 0.0
  %343 = vmatmul.mubr.f32.gmra.mrb[0].mxu0 %v193
  %v344 = vpop.f32.mrb[0].mxu0
  %v345 = vadd.f32 %v276, %v344
  %v346 = vpop.f32.mrb[0].mxu0
  %347 = vmatprep.mubr.f32.mxu0 0.0
  %348 = vmatmul.mubr.f32.gmra.mrb[0].mxu0 %v196
  %v349 = vpop.f32.mrb[0].mxu0
  %v350 = vadd.f32 %v276, %v349
  %v351 = vpop.f32.mrb[0].mxu0
  %352 = vmatprep.mubr.f32.mxu0 0.0
  %353 = vmatmul.mubr.f32.gmra.mrb[0].mxu0 %v201
  %v354 = vpop.f32.mrb[0].mxu0
  %v355 = vadd.f32 %v276, %v354
  %v356 = vpop.f32.mrb[0].mxu0
  %357 = vmatprep.mubr.f32.mxu0 0.0
  %358 = vmatmul.mubr.f32.gmra.mrb[0].mxu0 %v204
  %v359 = vpop.f32.mrb[0].mxu0
  %v360 = vadd.f32 %v276, %v359
  %v361 = vpop.f32.mrb[0].mxu0
  %362 = vmatprep.mubr.f32.mxu0 0.0
  %363 = vmatmul.mubr.f32.gmra.mrb[0].mxu0 %v209
  %v364 = vpop.f32.mrb[0].mxu0
  %v365 = vadd.f32 %v276, %v364
  %v366 = vpop.f32.mrb[0].mxu0
  %367 = vmatprep.mubr.f32.mxu0 0.0
  %368 = vmatmul.mubr.f32.gmra.mrb[0].mxu0 %v212
  %v369 = vpop.f32.mrb[0].mxu0
  %v370 = vadd.f32 %v276, %v369
  %v371 = vpop.f32.mrb[0].mxu0
  %372 = vmatprep.mubr.f32.mxu0 0.0
  %373 = vmatmul.mubr.f32.gmra.mrb[0].mxu0 %v217
  %v374 = vpop.f32.mrb[0].mxu0
  %v375 = vadd.f32 %v276, %v374
  %v376 = vpop.f32.mrb[0].mxu0
  %377 = vmatprep.mubr.f32.mxu0 0.0
  %378 = vmatmul.mubr.f32.gmra.mrb[0].mxu0 %v220
  %v379 = vpop.f32.mrb[0].mxu0
  %v380 = vadd.f32 %v276, %v379
  %v381 = vpop.f32.mrb[0].mxu0
  %382 = vmatprep.mubr.f32.mxu0 0.0
  %383 = vmatmul.mubr.f32.gmra.mrb[0].mxu0 %v225
  %v384 = vpop.f32.mrb[0].mxu0
  %v385 = vadd.f32 %v276, %v384
  %v386 = vpop.f32.mrb[0].mxu0
  %387 = vmatprep.mubr.f32.mxu0 0.0
  %388 = vmatmul.mubr.f32.gmra.mrb[0].mxu0 %v228
  %v389 = vpop.f32.mrb[0].mxu0
  %v390 = vadd.f32 %v276, %v389
  %v391 = vpop.f32.mrb[0].mxu0
  %392 = vmatprep.mubr.f32.mxu0 0.0
  %393 = vmatmul.mubr.f32.gmra.mrb[0].mxu0 %v233
  %v394 = vpop.f32.mrb[0].mxu0
  %v395 = vadd.f32 %v276, %v394
  %v396 = vpop.f32.mrb[0].mxu0
  %397 = vmatprep.mubr.f32.mxu0 0.0
  %398 = vmatmul.mubr.f32.gmra.mrb[0].mxu0 %v236
  %v399 = vpop.f32.mrb[0].mxu0
  %v400 = vadd.f32 %v276, %v399
  %v401 = vpop.f32.mrb[0].mxu0
  %402 = vmatprep.mubr.f32.mxu0 0.0
  %403 = vmatmul.mubr.f32.gmra.mrb[0].mxu0 %v241
  %v404 = vpop.f32.mrb[0].mxu0
  %v405 = vadd.f32 %v276, %v404
  %v406 = vpop.f32.mrb[0].mxu0
  %407 = vmatprep.mubr.f32.mxu0 0.0
  %408 = vmatmul.mubr.f32.gmra.mrb[0].mxu0 %v244
  %v409 = vpop.f32.mrb[0].mxu0
  %v410 = vadd.f32 %v276, %v409
  %v411 = vpop.f32.mrb[0].mxu0
  %412 = vmatprep.mubr.f32.mxu0 0.0
  %413 = vmatmul.mubr.f32.gmra.mrb[0].mxu0 %v249
  %v414 = vpop.f32.mrb[0].mxu0
  %v415 = vadd.f32 %v276, %v414
  %v416 = vpop.f32.mrb[0].mxu0
  %417 = vmatprep.mubr.f32.mxu0 0.0
  %418 = vmatmul.mubr.f32.gmra.mrb[0].mxu0 %v252
  %v419 = vpop.f32.mrb[0].mxu0
  %v420 = vadd.f32 %v276, %v419
  %v421 = vpop.f32.mrb[0].mxu0
  %422 = vdwg.mxu0
  %v423 = vtanh.pop %v345
  %v424 = vtanh.pop %v350
  %v425 = vtanh.pop %v355
  %v426 = vtanh.pop %v360
  %v427 = vtanh.pop %v365
  %v428 = vtanh.pop %v370
  %v429 = vtanh.pop %v375
  %v430 = vtanh.pop %v380
  %v431 = vtanh.pop %v385
  %v432 = vtanh.pop %v390
  %v433 = vtanh.pop %v395
  %v434 = vtanh.pop %v400
  %v435 = vtanh.pop %v405
  %v436 = vtanh.pop %v410
  %v437 = vtanh.pop %v415
  %v438 = vtanh.pop %v420
  %439 = vst [vmem:[%s6] sm:$0xff] %v423
  %440 = vst [vmem:[%s6 + $0x8] sm:$0xff] %v424
  %441 = vst [vmem:[%s6 + $0x10] sm:$0xff] %v425
  %442 = vst [vmem:[%s6 + $0x18] sm:$0xff] %v426
  %443 = vst [vmem:[%s6 + $0x20] sm:$0xff] %v427
  %444 = vst [vmem:[%s6 + $0x28] sm:$0xff] %v428
  %445 = vst [vmem:[%s6 + $0x30] sm:$0xff] %v429
  %446 = vst [vmem:[%s6 + $0x38] sm:$0xff] %v430
  %447 = vst [vmem:[%s6 + $0x40] sm:$0xff] %v431
  %448 = vst [vmem:[%s6 + $0x48] sm:$0xff] %v432
  %449 = vst [vmem:[%s6 + $0x50] sm:$0xff] %v433
  %450 = vst [vmem:[%s6 + $0x58] sm:$0xff] %v434
  %451 = vst [vmem:[%s6 + $0x60] sm:$0xff] %v435
  %452 = vst [vmem:[%s6 + $0x68] sm:$0xff] %v436
  %453 = vst [vmem:[%s6 + $0x70] sm:$0xff] %v437
  %454 = vst [vmem:[%s6 + $0x78] sm:$0xff] %v438
  %v455 = vpack.c.bf16 %v424, %v423
  %v456 = vpack.c.bf16 %v426, %v425
  %v457 = vpack.c.bf16 %v428, %v427
  %v458 = vpack.c.bf16 %v430, %v429
  %v459 = vpack.c.bf16 %v432, %v431
  %v460 = vpack.c.bf16 %v434, %v433
  %v461 = vpack.c.bf16 %v436, %v435
  %v462 = vpack.c.bf16 %v438, %v437
  %463 = vst [vmem:[#allocation2] sm:$0xff] %v455
  %464 = vst [vmem:[#allocation2 + $0x8] sm:$0xff] %v456
  %465 = vst [vmem:[#allocation2 + $0x10] sm:$0xff] %v457
  %466 = vst [vmem:[#allocation2 + $0x18] sm:$0xff] %v458
  %467 = vst [vmem:[#allocation2 + $0x20] sm:$0xff] %v459
  %468 = vst [vmem:[#allocation2 + $0x28] sm:$0xff] %v460
  %469 = vst [vmem:[#allocation2 + $0x30] sm:$0xff] %v461
  %470 = vst [vmem:[#allocation2 + $0x38] sm:$0xff] %v462
  %v471 = vld [vmem:[#allocation2] sm:$0xff]
  %v472 = vld [vmem:[#allocation2 + $0x8] sm:$0xff]
  %v473 = vld [vmem:[#allocation2 + $0x10] sm:$0xff]
  %v474 = vld [vmem:[#allocation2 + $0x18] sm:$0xff]
  %v475 = vld [vmem:[#allocation2 + $0x20] sm:$0xff]
  %v476 = vld [vmem:[#allocation2 + $0x28] sm:$0xff]
  %v477 = vld [vmem:[#allocation2 + $0x30] sm:$0xff]
  %v478 = vld [vmem:[#allocation2 + $0x38] sm:$0xff]
  %479 = vmatprep.subr.bf16.mxu0 0
  %480 = vmatpush1.bf16.msra.mxu0 %v471
  %481 = vmatprep.subr.bf16.mxu0 0
  %482 = vmatpush1.bf16.msra.mxu0 %v472
  %483 = vmatprep.subr.bf16.mxu0 0
  %484 = vmatpush1.bf16.msra.mxu0 %v473
  %485 = vmatprep.subr.bf16.mxu0 0
  %486 = vmatpush1.bf16.msra.mxu0 %v474
  %487 = vmatprep.subr.bf16.mxu0 0
  %488 = vmatpush1.bf16.msra.mxu0 %v475
  %489 = vmatprep.subr.bf16.mxu0 0
  %490 = vmatpush1.bf16.msra.mxu0 %v476
  %491 = vmatprep.subr.bf16.mxu0 0
  %492 = vmatpush1.bf16.msra.mxu0 %v477
  %493 = vmatprep.subr.bf16.mxu0 0
  %494 = vmatpush1.bf16.msra.mxu0 %v478
  %495 = vmatprep.subr.bf16.mxu0 0
  %496 = vmatpush1.bf16.msra.mxu0 0
  %497 = vmatprep.subr.bf16.mxu0 0
  %498 = vmatpush1.bf16.msra.mxu0 0
  %499 = vmatprep.subr.bf16.mxu0 0
  %500 = vmatpush1.bf16.msra.mxu0 0
  %501 = vmatprep.subr.bf16.mxu0 0
  %502 = vmatpush1.bf16.msra.mxu0 0
  %503 = vmatprep.subr.bf16.mxu0 0
  %504 = vmatpush1.bf16.msra.mxu0 0
  %505 = vmatprep.subr.bf16.mxu0 0
  %506 = vmatpush1.bf16.msra.mxu0 0
  %507 = vmatprep.subr.bf16.mxu0 0
  %508 = vmatpush1.bf16.msra.mxu0 0
  %509 = vmatprep.subr.bf16.mxu0 0
  %510 = vmatpush1.bf16.msra.mxu0 0
  %511 = vmatprep.mubr.bf16.mxu0 0
  %512 = vmatmul.mubr.bf16.gmra.mrb[0].mxu0 %v94
  %v513 = vpop.f32.mrb[0].mxu0
  %v514 = vadd.f32 0.0, %v513
  %v515 = vpop.f32.mrb[0].mxu0
  %v516 = vpop.f32.mrb[0].mxu0
  %v517 = vadd.f32 0.0, %v516
  %v518 = vpop.f32.mrb[0].mxu0
  %519 = vmatprep.mubr.bf16.mxu0 0
  %520 = vmatmul.mubr.bf16.gmra.mrb[0].mxu0 %v95
  %v521 = vpop.f32.mrb[0].mxu0
  %v522 = vadd.f32 0.0, %v521
  %v523 = vpop.f32.mrb[0].mxu0
  %v524 = vpop.f32.mrb[0].mxu0
  %v525 = vadd.f32 0.0, %v524
  %v526 = vpop.f32.mrb[0].mxu0
  %527 = vmatprep.mubr.bf16.mxu0 0
  %528 = vmatmul.mubr.bf16.gmra.mrb[0].mxu0 %v96
  %v529 = vpop.f32.mrb[0].mxu0
  %v530 = vadd.f32 0.0, %v529
  %v531 = vpop.f32.mrb[0].mxu0
  %v532 = vpop.f32.mrb[0].mxu0
  %v533 = vadd.f32 0.0, %v532
  %v534 = vpop.f32.mrb[0].mxu0
  %535 = vmatprep.mubr.bf16.mxu0 0
  %536 = vmatmul.mubr.bf16.gmra.mrb[0].mxu0 %v97
  %v537 = vpop.f32.mrb[0].mxu0
  %v538 = vadd.f32 0.0, %v537
  %v539 = vpop.f32.mrb[0].mxu0
  %v540 = vpop.f32.mrb[0].mxu0
  %v541 = vadd.f32 0.0, %v540
  %v542 = vpop.f32.mrb[0].mxu0
  %543 = vmatprep.mubr.bf16.mxu0 0
  %544 = vmatmul.mubr.bf16.gmra.mrb[0].mxu0 %v98
  %v545 = vpop.f32.mrb[0].mxu0
  %v546 = vadd.f32 0.0, %v545
  %v547 = vpop.f32.mrb[0].mxu0
  %v548 = vpop.f32.mrb[0].mxu0
  %v549 = vadd.f32 0.0, %v548
  %v550 = vpop.f32.mrb[0].mxu0
  %551 = vmatprep.mubr.bf16.mxu0 0
  %552 = vmatmul.mubr.bf16.gmra.mrb[0].mxu0 %v99
  %v553 = vpop.f32.mrb[0].mxu0
  %v554 = vadd.f32 0.0, %v553
  %v555 = vpop.f32.mrb[0].mxu0
  %v556 = vpop.f32.mrb[0].mxu0
  %v557 = vadd.f32 0.0, %v556
  %v558 = vpop.f32.mrb[0].mxu0
  %559 = vmatprep.mubr.bf16.mxu0 0
  %560 = vmatmul.mubr.bf16.gmra.mrb[0].mxu0 %v100
  %v561 = vpop.f32.mrb[0].mxu0
  %v562 = vadd.f32 0.0, %v561
  %v563 = vpop.f32.mrb[0].mxu0
  %v564 = vpop.f32.mrb[0].mxu0
  %v565 = vadd.f32 0.0, %v564
  %v566 = vpop.f32.mrb[0].mxu0
  %567 = vmatprep.mubr.bf16.mxu0 0
  %568 = vmatmul.mubr.bf16.gmra.mrb[0].mxu0 %v101
  %v569 = vpop.f32.mrb[0].mxu0
  %v570 = vadd.f32 0.0, %v569
  %v571 = vpop.f32.mrb[0].mxu0
  %v572 = vpop.f32.mrb[0].mxu0
  %v573 = vadd.f32 0.0, %v572
  %v574 = vpop.f32.mrb[0].mxu0
  %575 = vdwg.mxu0
  %v576 = vld [vmem:[%s3] sm:$0xff]
  %v577 = vld [vmem:[%s3 + $0x8] sm:$0xff]
  %v578 = vld [vmem:[%s3 + $0x10] sm:$0xff]
  %v579 = vld [vmem:[%s3 + $0x18] sm:$0xff]
  %v580 = vld [vmem:[%s3 + $0x20] sm:$0xff]
  %v581 = vld [vmem:[%s3 + $0x28] sm:$0xff]
  %v582 = vld [vmem:[%s3 + $0x30] sm:$0xff]
  %v583 = vld [vmem:[%s3 + $0x38] sm:$0xff]
  %v584 = vld [vmem:[%s3 + $0x40] sm:$0xff]
  %v585 = vld [vmem:[%s3 + $0x48] sm:$0xff]
  %v586 = vld [vmem:[%s3 + $0x50] sm:$0xff]
  %v587 = vld [vmem:[%s3 + $0x58] sm:$0xff]
  %v588 = vld [vmem:[%s3 + $0x60] sm:$0xff]
  %v589 = vld [vmem:[%s3 + $0x68] sm:$0xff]
  %v590 = vld [vmem:[%s3 + $0x70] sm:$0xff]
  %v591 = vld [vmem:[%s3 + $0x78] sm:$0xff]
  %s592 = scalar_lea.vmem %s4, 1
  %v593 = vld [vmem:[%s592] sm:$0x1]
  %v595 = vlaneseq
  %v596 = vshrl.u32 %v595, 7
  %v597 = vsub.s32 0, %v596
  %v598 = vrot.slane %v593, %v597
  %600 = vmatprep.subr.mxu0 0.0
  %601 = vmatpush1.msra.mxu0 %v576
  %602 = vmatprep.subr.mxu0 0.0
  %603 = vmatpush1.msra.mxu0 %v577
  %604 = vmatprep.subr.mxu0 0.0
  %605 = vmatpush1.msra.mxu0 %v578
  %606 = vmatprep.subr.mxu0 0.0
  %607 = vmatpush1.msra.mxu0 %v579
  %608 = vmatprep.subr.mxu0 0.0
  %609 = vmatpush1.msra.mxu0 %v580
  %610 = vmatprep.subr.mxu0 0.0
  %611 = vmatpush1.msra.mxu0 %v581
  %612 = vmatprep.subr.mxu0 0.0
  %613 = vmatpush1.msra.mxu0 %v582
  %614 = vmatprep.subr.mxu0 0.0
  %615 = vmatpush1.msra.mxu0 %v583
  %616 = vmatprep.subr.mxu0 0.0
  %617 = vmatpush1.msra.mxu0 %v584
  %618 = vmatprep.subr.mxu0 0.0
  %619 = vmatpush1.msra.mxu0 %v585
  %620 = vmatprep.subr.mxu0 0.0
  %621 = vmatpush1.msra.mxu0 %v586
  %622 = vmatprep.subr.mxu0 0.0
  %623 = vmatpush1.msra.mxu0 %v587
  %624 = vmatprep.subr.mxu0 0.0
  %625 = vmatpush1.msra.mxu0 %v588
  %626 = vmatprep.subr.mxu0 0.0
  %627 = vmatpush1.msra.mxu0 %v589
  %628 = vmatprep.subr.mxu0 0.0
  %629 = vmatpush1.msra.mxu0 %v590
  %630 = vmatprep.subr.mxu0 0.0
  %631 = vmatpush1.msra.mxu0 %v591
  %632 = vmatprep.subr.mxu0 0.0
  %633 = vmatpush1.msra.mxu0 0.0
  %634 = vmatprep.subr.mxu0 0.0
  %635 = vmatpush1.msra.mxu0 0.0
  %636 = vmatprep.subr.mxu0 0.0
  %637 = vmatpush1.msra.mxu0 0.0
  %638 = vmatprep.subr.mxu0 0.0
  %639 = vmatpush1.msra.mxu0 0.0
  %640 = vmatprep.subr.mxu0 0.0
  %641 = vmatpush1.msra.mxu0 0.0
  %642 = vmatprep.subr.mxu0 0.0
  %643 = vmatpush1.msra.mxu0 0.0
  %644 = vmatprep.subr.mxu0 0.0
  %645 = vmatpush1.msra.mxu0 0.0
  %646 = vmatprep.subr.mxu0 0.0
  %647 = vmatpush1.msra.mxu0 0.0
  %648 = vmatprep.subr.mxu0 0.0
  %649 = vmatpush1.msra.mxu0 0.0
  %650 = vmatprep.subr.mxu0 0.0
  %651 = vmatpush1.msra.mxu0 0.0
  %652 = vmatprep.subr.mxu0 0.0
  %653 = vmatpush1.msra.mxu0 0.0
  %654 = vmatprep.subr.mxu0 0.0
  %655 = vmatpush1.msra.mxu0 0.0
  %656 = vmatprep.subr.mxu0 0.0
  %657 = vmatpush1.msra.mxu0 0.0
  %658 = vmatprep.subr.mxu0 0.0
  %659 = vmatpush1.msra.mxu0 0.0
  %660 = vmatprep.subr.mxu0 0.0
  %661 = vmatpush1.msra.mxu0 0.0
  %662 = vmatprep.subr.mxu0 0.0
  %663 = vmatpush1.msra.mxu0 0.0
  %664 = vmatprep.mubr.f32.mxu0 0.0
  %665 = vmatmul.mubr.f32.gmra.mrb[0].mxu0 %v514
  %v666 = vpop.f32.mrb[0].mxu0
  %v667 = vadd.f32 %v598, %v666
  %v668 = vpop.f32.mrb[0].mxu0
  %669 = vmatprep.mubr.f32.mxu0 0.0
  %670 = vmatmul.mubr.f32.gmra.mrb[0].mxu0 %v517
  %v671 = vpop.f32.mrb[0].mxu0
  %v672 = vadd.f32 %v598, %v671
  %v673 = vpop.f32.mrb[0].mxu0
  %674 = vmatprep.mubr.f32.mxu0 0.0
  %675 = vmatmul.mubr.f32.gmra.mrb[0].mxu0 %v522
  %v676 = vpop.f32.mrb[0].mxu0
  %v677 = vadd.f32 %v598, %v676
  %v678 = vpop.f32.mrb[0].mxu0
  %679 = vmatprep.mubr.f32.mxu0 0.0
  %680 = vmatmul.mubr.f32.gmra.mrb[0].mxu0 %v525
  %v681 = vpop.f32.mrb[0].mxu0
  %v682 = vadd.f32 %v598, %v681
  %v683 = vpop.f32.mrb[0].mxu0
  %684 = vmatprep.mubr.f32.mxu0 0.0
  %685 = vmatmul.mubr.f32.gmra.mrb[0].mxu0 %v530
  %v686 = vpop.f32.mrb[0].mxu0
  %v687 = vadd.f32 %v598, %v686
  %v688 = vpop.f32.mrb[0].mxu0
  %689 = vmatprep.mubr.f32.mxu0 0.0
  %690 = vmatmul.mubr.f32.gmra.mrb[0].mxu0 %v533
  %v691 = vpop.f32.mrb[0].mxu0
  %v692 = vadd.f32 %v598, %v691
  %v693 = vpop.f32.mrb[0].mxu0
  %694 = vmatprep.mubr.f32.mxu0 0.0
  %695 = vmatmul.mubr.f32.gmra.mrb[0].mxu0 %v538
  %v696 = vpop.f32.mrb[0].mxu0
  %v697 = vadd.f32 %v598, %v696
  %v698 = vpop.f32.mrb[0].mxu0
  %699 = vmatprep.mubr.f32.mxu0 0.0
  %700 = vmatmul.mubr.f32.gmra.mrb[0].mxu0 %v541
  %v701 = vpop.f32.mrb[0].mxu0
  %v702 = vadd.f32 %v598, %v701
  %v703 = vpop.f32.mrb[0].mxu0
  %704 = vmatprep.mubr.f32.mxu0 0.0
  %705 = vmatmul.mubr.f32.gmra.mrb[0].mxu0 %v546
  %v706 = vpop.f32.mrb[0].mxu0
  %v707 = vadd.f32 %v598, %v706
  %v708 = vpop.f32.mrb[0].mxu0
  %709 = vmatprep.mubr.f32.mxu0 0.0
  %710 = vmatmul.mubr.f32.gmra.mrb[0].mxu0 %v549
  %v711 = vpop.f32.mrb[0].mxu0
  %v712 = vadd.f32 %v598, %v711
  %v713 = vpop.f32.mrb[0].mxu0
  %714 = vmatprep.mubr.f32.mxu0 0.0
  %715 = vmatmul.mubr.f32.gmra.mrb[0].mxu0 %v554
  %v716 = vpop.f32.mrb[0].mxu0
  %v717 = vadd.f32 %v598, %v716
  %v718 = vpop.f32.mrb[0].mxu0
  %719 = vmatprep.mubr.f32.mxu0 0.0
  %720 = vmatmul.mubr.f32.gmra.mrb[0].mxu0 %v557
  %v721 = vpop.f32.mrb[0].mxu0
  %v722 = vadd.f32 %v598, %v721
  %v723 = vpop.f32.mrb[0].mxu0
  %724 = vmatprep.mubr.f32.mxu0 0.0
  %725 = vmatmul.mubr.f32.gmra.mrb[0].mxu0 %v562
  %v726 = vpop.f32.mrb[0].mxu0
  %v727 = vadd.f32 %v598, %v726
  %v728 = vpop.f32.mrb[0].mxu0
  %729 = vmatprep.mubr.f32.mxu0 0.0
  %730 = vmatmul.mubr.f32.gmra.mrb[0].mxu0 %v565
  %v731 = vpop.f32.mrb[0].mxu0
  %v732 = vadd.f32 %v598, %v731
  %v733 = vpop.f32.mrb[0].mxu0
  %734 = vmatprep.mubr.f32.mxu0 0.0
  %735 = vmatmul.mubr.f32.gmra.mrb[0].mxu0 %v570
  %v736 = vpop.f32.mrb[0].mxu0
  %v737 = vadd.f32 %v598, %v736
  %v738 = vpop.f32.mrb[0].mxu0
  %739 = vmatprep.mubr.f32.mxu0 0.0
  %740 = vmatmul.mubr.f32.gmra.mrb[0].mxu0 %v573
  %v741 = vpop.f32.mrb[0].mxu0
  %v742 = vadd.f32 %v598, %v741
  %v743 = vpop.f32.mrb[0].mxu0
  %744 = vdwg.mxu0
  %v745 = vtanh.pop %v667
  %v746 = vtanh.pop %v672
  %v747 = vtanh.pop %v677
  %v748 = vtanh.pop %v682
  %v749 = vtanh.pop %v687
  %v750 = vtanh.pop %v692
  %v751 = vtanh.pop %v697
  %v752 = vtanh.pop %v702
  %v753 = vtanh.pop %v707
  %v754 = vtanh.pop %v712
  %v755 = vtanh.pop %v717
  %v756 = vtanh.pop %v722
  %v757 = vtanh.pop %v727
  %v758 = vtanh.pop %v732
  %v759 = vtanh.pop %v737
  %v760 = vtanh.pop %v742
  %761 = vst [vmem:[%s7] sm:$0xff] %v745
  %762 = vst [vmem:[%s7 + $0x8] sm:$0xff] %v746
  %763 = vst [vmem:[%s7 + $0x10] sm:$0xff] %v747
  %764 = vst [vmem:[%s7 + $0x18] sm:$0xff] %v748
  %765 = vst [vmem:[%s7 + $0x20] sm:$0xff] %v749
  %766 = vst [vmem:[%s7 + $0x28] sm:$0xff] %v750
  %767 = vst [vmem:[%s7 + $0x30] sm:$0xff] %v751
  %768 = vst [vmem:[%s7 + $0x38] sm:$0xff] %v752
  %769 = vst [vmem:[%s7 + $0x40] sm:$0xff] %v753
  %770 = vst [vmem:[%s7 + $0x48] sm:$0xff] %v754
  %771 = vst [vmem:[%s7 + $0x50] sm:$0xff] %v755
  %772 = vst [vmem:[%s7 + $0x58] sm:$0xff] %v756
  %773 = vst [vmem:[%s7 + $0x60] sm:$0xff] %v757
  %774 = vst [vmem:[%s7 + $0x68] sm:$0xff] %v758
  %775 = vst [vmem:[%s7 + $0x70] sm:$0xff] %v759
  %776 = vst [vmem:[%s7 + $0x78] sm:$0xff] %v760
  %v777 = vpack.c.bf16 %v746, %v745
  %v778 = vpack.c.bf16 %v748, %v747
  %v779 = vpack.c.bf16 %v750, %v749
  %v780 = vpack.c.bf16 %v752, %v751
  %v781 = vpack.c.bf16 %v754, %v753
  %v782 = vpack.c.bf16 %v756, %v755
  %v783 = vpack.c.bf16 %v758, %v757
  %v784 = vpack.c.bf16 %v760, %v759
  %785 = vst [vmem:[#allocation2] sm:$0xff] %v777
  %786 = vst [vmem:[#allocation2 + $0x8] sm:$0xff] %v778
  %787 = vst [vmem:[#allocation2 + $0x10] sm:$0xff] %v779
  %788 = vst [vmem:[#allocation2 + $0x18] sm:$0xff] %v780
  %789 = vst [vmem:[#allocation2 + $0x20] sm:$0xff] %v781
  %790 = vst [vmem:[#allocation2 + $0x28] sm:$0xff] %v782
  %791 = vst [vmem:[#allocation2 + $0x30] sm:$0xff] %v783
  %792 = vst [vmem:[#allocation2 + $0x38] sm:$0xff] %v784
  %v793 = vld [vmem:[#allocation2] sm:$0xff]
  %v794 = vld [vmem:[#allocation2 + $0x8] sm:$0xff]
  %v795 = vld [vmem:[#allocation2 + $0x10] sm:$0xff]
  %v796 = vld [vmem:[#allocation2 + $0x18] sm:$0xff]
  %v797 = vld [vmem:[#allocation2 + $0x20] sm:$0xff]
  %v798 = vld [vmem:[#allocation2 + $0x28] sm:$0xff]
  %v799 = vld [vmem:[#allocation2 + $0x30] sm:$0xff]
  %v800 = vld [vmem:[#allocation2 + $0x38] sm:$0xff]
  %801 = vmatprep.subr.bf16.mxu0 0
  %802 = vmatpush1.bf16.msra.mxu0 %v793
  %803 = vmatprep.subr.bf16.mxu0 0
  %804 = vmatpush1.bf16.msra.mxu0 %v794
  %805 = vmatprep.subr.bf16.mxu0 0
  %806 = vmatpush1.bf16.msra.mxu0 %v795
  %807 = vmatprep.subr.bf16.mxu0 0
  %808 = vmatpush1.bf16.msra.mxu0 %v796
  %809 = vmatprep.subr.bf16.mxu0 0
  %810 = vmatpush1.bf16.msra.mxu0 %v797
  %811 = vmatprep.subr.bf16.mxu0 0
  %812 = vmatpush1.bf16.msra.mxu0 %v798
  %813 = vmatprep.subr.bf16.mxu0 0
  %814 = vmatpush1.bf16.msra.mxu0 %v799
  %815 = vmatprep.subr.bf16.mxu0 0
  %816 = vmatpush1.bf16.msra.mxu0 %v800
  %817 = vmatprep.subr.bf16.mxu0 0
  %818 = vmatpush1.bf16.msra.mxu0 0
  %819 = vmatprep.subr.bf16.mxu0 0
  %820 = vmatpush1.bf16.msra.mxu0 0
  %821 = vmatprep.subr.bf16.mxu0 0
  %822 = vmatpush1.bf16.msra.mxu0 0
  %823 = vmatprep.subr.bf16.mxu0 0
  %824 = vmatpush1.bf16.msra.mxu0 0
  %825 = vmatprep.subr.bf16.mxu0 0
  %826 = vmatpush1.bf16.msra.mxu0 0
  %827 = vmatprep.subr.bf16.mxu0 0
  %828 = vmatpush1.bf16.msra.mxu0 0
  %829 = vmatprep.subr.bf16.mxu0 0
  %830 = vmatpush1.bf16.msra.mxu0 0
  %831 = vmatprep.subr.bf16.mxu0 0
  %832 = vmatpush1.bf16.msra.mxu0 0
  %833 = vmatprep.mubr.bf16.mxu0 0
  %834 = vmatmul.mubr.bf16.gmra.mrb[0].mxu0 %v94
  %v835 = vpop.f32.mrb[0].mxu0
  %v836 = vadd.f32 0.0, %v835
  %v837 = vpop.f32.mrb[0].mxu0
  %v838 = vpop.f32.mrb[0].mxu0
  %v839 = vadd.f32 0.0, %v838
  %v840 = vpop.f32.mrb[0].mxu0
  %841 = vmatprep.mubr.bf16.mxu0 0
  %842 = vmatmul.mubr.bf16.gmra.mrb[0].mxu0 %v95
  %v843 = vpop.f32.mrb[0].mxu0
  %v844 = vadd.f32 0.0, %v843
  %v845 = vpop.f32.mrb[0].mxu0
  %v846 = vpop.f32.mrb[0].mxu0
  %v847 = vadd.f32 0.0, %v846
  %v848 = vpop.f32.mrb[0].mxu0
  %849 = vmatprep.mubr.bf16.mxu0 0
  %850 = vmatmul.mubr.bf16.gmra.mrb[0].mxu0 %v96
  %v851 = vpop.f32.mrb[0].mxu0
  %v852 = vadd.f32 0.0, %v851
  %v853 = vpop.f32.mrb[0].mxu0
  %v854 = vpop.f32.mrb[0].mxu0
  %v855 = vadd.f32 0.0, %v854
  %v856 = vpop.f32.mrb[0].mxu0
  %857 = vmatprep.mubr.bf16.mxu0 0
  %858 = vmatmul.mubr.bf16.gmra.mrb[0].mxu0 %v97
  %v859 = vpop.f32.mrb[0].mxu0
  %v860 = vadd.f32 0.0, %v859
  %v861 = vpop.f32.mrb[0].mxu0
  %v862 = vpop.f32.mrb[0].mxu0
  %v863 = vadd.f32 0.0, %v862
  %v864 = vpop.f32.mrb[0].mxu0
  %865 = vmatprep.mubr.bf16.mxu0 0
  %866 = vmatmul.mubr.bf16.gmra.mrb[0].mxu0 %v98
  %v867 = vpop.f32.mrb[0].mxu0
  %v868 = vadd.f32 0.0, %v867
  %v869 = vpop.f32.mrb[0].mxu0
  %v870 = vpop.f32.mrb[0].mxu0
  %v871 = vadd.f32 0.0, %v870
  %v872 = vpop.f32.mrb[0].mxu0
  %873 = vmatprep.mubr.bf16.mxu0 0
  %874 = vmatmul.mubr.bf16.gmra.mrb[0].mxu0 %v99
  %v875 = vpop.f32.mrb[0].mxu0
  %v876 = vadd.f32 0.0, %v875
  %v877 = vpop.f32.mrb[0].mxu0
  %v878 = vpop.f32.mrb[0].mxu0
  %v879 = vadd.f32 0.0, %v878
  %v880 = vpop.f32.mrb[0].mxu0
  %881 = vmatprep.mubr.bf16.mxu0 0
  %882 = vmatmul.mubr.bf16.gmra.mrb[0].mxu0 %v100
  %v883 = vpop.f32.mrb[0].mxu0
  %v884 = vadd.f32 0.0, %v883
  %v885 = vpop.f32.mrb[0].mxu0
  %v886 = vpop.f32.mrb[0].mxu0
  %v887 = vadd.f32 0.0, %v886
  %v888 = vpop.f32.mrb[0].mxu0
  %889 = vmatprep.mubr.bf16.mxu0 0
  %890 = vmatmul.mubr.bf16.gmra.mrb[0].mxu0 %v101
  %v891 = vpop.f32.mrb[0].mxu0
  %v892 = vadd.f32 0.0, %v891
  %v893 = vpop.f32.mrb[0].mxu0
  %v894 = vpop.f32.mrb[0].mxu0
  %v895 = vadd.f32 0.0, %v894
  %v896 = vpop.f32.mrb[0].mxu0
  %897 = vdwg.mxu0
  %s898 = scalar_lea.vmem %s3, 128
  %v899 = vld [vmem:[%s898] sm:$0xff]
  %v900 = vld [vmem:[%s898 + $0x8] sm:$0xff]
  %v901 = vld [vmem:[%s898 + $0x10] sm:$0xff]
  %v902 = vld [vmem:[%s898 + $0x18] sm:$0xff]
  %v903 = vld [vmem:[%s898 + $0x20] sm:$0xff]
  %v904 = vld [vmem:[%s898 + $0x28] sm:$0xff]
  %v905 = vld [vmem:[%s898 + $0x30] sm:$0xff]
  %v906 = vld [vmem:[%s898 + $0x38] sm:$0xff]
  %v907 = vld [vmem:[%s898 + $0x40] sm:$0xff]
  %v908 = vld [vmem:[%s898 + $0x48] sm:$0xff]
  %v909 = vld [vmem:[%s898 + $0x50] sm:$0xff]
  %v910 = vld [vmem:[%s898 + $0x58] sm:$0xff]
  %v911 = vld [vmem:[%s898 + $0x60] sm:$0xff]
  %v912 = vld [vmem:[%s898 + $0x68] sm:$0xff]
  %v913 = vld [vmem:[%s898 + $0x70] sm:$0xff]
  %v914 = vld [vmem:[%s898 + $0x78] sm:$0xff]
  %s915 = scalar_lea.vmem %s4, 2
  %v916 = vld [vmem:[%s915] sm:$0x1]
  %v918 = vlaneseq
  %v919 = vshrl.u32 %v918, 7
  %v920 = vsub.s32 0, %v919
  %v921 = vrot.slane %v916, %v920
  %923 = vmatprep.subr.mxu0 0.0
  %924 = vmatpush1.msra.mxu0 %v899
  %925 = vmatprep.subr.mxu0 0.0
  %926 = vmatpush1.msra.mxu0 %v900
  %927 = vmatprep.subr.mxu0 0.0
  %928 = vmatpush1.msra.mxu0 %v901
  %929 = vmatprep.subr.mxu0 0.0
  %930 = vmatpush1.msra.mxu0 %v902
  %931 = vmatprep.subr.mxu0 0.0
  %932 = vmatpush1.msra.mxu0 %v903
  %933 = vmatprep.subr.mxu0 0.0
  %934 = vmatpush1.msra.mxu0 %v904
  %935 = vmatprep.subr.mxu0 0.0
  %936 = vmatpush1.msra.mxu0 %v905
  %937 = vmatprep.subr.mxu0 0.0
  %938 = vmatpush1.msra.mxu0 %v906
  %939 = vmatprep.subr.mxu0 0.0
  %940 = vmatpush1.msra.mxu0 %v907
  %941 = vmatprep.subr.mxu0 0.0
  %942 = vmatpush1.msra.mxu0 %v908
  %943 = vmatprep.subr.mxu0 0.0
  %944 = vmatpush1.msra.mxu0 %v909
  %945 = vmatprep.subr.mxu0 0.0
  %946 = vmatpush1.msra.mxu0 %v910
  %947 = vmatprep.subr.mxu0 0.0
  %948 = vmatpush1.msra.mxu0 %v911
  %949 = vmatprep.subr.mxu0 0.0
  %950 = vmatpush1.msra.mxu0 %v912
  %951 = vmatprep.subr.mxu0 0.0
  %952 = vmatpush1.msra.mxu0 %v913
  %953 = vmatprep.subr.mxu0 0.0
  %954 = vmatpush1.msra.mxu0 %v914
  %955 = vmatprep.subr.mxu0 0.0
  %956 = vmatpush1.msra.mxu0 0.0
  %957 = vmatprep.subr.mxu0 0.0
  %958 = vmatpush1.msra.mxu0 0.0
  %959 = vmatprep.subr.mxu0 0.0
  %960 = vmatpush1.msra.mxu0 0.0
  %961 = vmatprep.subr.mxu0 0.0
  %962 = vmatpush1.msra.mxu0 0.0
  %963 = vmatprep.subr.mxu0 0.0
  %964 = vmatpush1.msra.mxu0 0.0
  %965 = vmatprep.subr.mxu0 0.0
  %966 = vmatpush1.msra.mxu0 0.0
  %967 = vmatprep.subr.mxu0 0.0
  %968 = vmatpush1.msra.mxu0 0.0
  %969 = vmatprep.subr.mxu0 0.0
  %970 = vmatpush1.msra.mxu0 0.0
  %971 = vmatprep.subr.mxu0 0.0
  %972 = vmatpush1.msra.mxu0 0.0
  %973 = vmatprep.subr.mxu0 0.0
  %974 = vmatpush1.msra.mxu0 0.0
  %975 = vmatprep.subr.mxu0 0.0
  %976 = vmatpush1.msra.mxu0 0.0
  %977 = vmatprep.subr.mxu0 0.0
  %978 = vmatpush1.msra.mxu0 0.0
  %979 = vmatprep.subr.mxu0 0.0
  %980 = vmatpush1.msra.mxu0 0.0
  %981 = vmatprep.subr.mxu0 0.0
  %982 = vmatpush1.msra.mxu0 0.0
  %983 = vmatprep.subr.mxu0 0.0
  %984 = vmatpush1.msra.mxu0 0.0
  %985 = vmatprep.subr.mxu0 0.0
  %986 = vmatpush1.msra.mxu0 0.0
  %987 = vmatprep.mubr.f32.mxu0 0.0
  %988 = vmatmul.mubr.f32.gmra.mrb[0].mxu0 %v836
  %v989 = vpop.f32.mrb[0].mxu0
  %v990 = vadd.f32 %v921, %v989
  %v991 = vpop.f32.mrb[0].mxu0
  %992 = vmatprep.mubr.f32.mxu0 0.0
  %993 = vmatmul.mubr.f32.gmra.mrb[0].mxu0 %v839
  %v994 = vpop.f32.mrb[0].mxu0
  %v995 = vadd.f32 %v921, %v994
  %v996 = vpop.f32.mrb[0].mxu0
  %997 = vmatprep.mubr.f32.mxu0 0.0
  %998 = vmatmul.mubr.f32.gmra.mrb[0].mxu0 %v844
  %v999 = vpop.f32.mrb[0].mxu0
  %v1000 = vadd.f32 %v921, %v999
  %v1001 = vpop.f32.mrb[0].mxu0
  %1002 = vmatprep.mubr.f32.mxu0 0.0
  %1003 = vmatmul.mubr.f32.gmra.mrb[0].mxu0 %v847
  %v1004 = vpop.f32.mrb[0].mxu0
  %v1005 = vadd.f32 %v921, %v1004
  %v1006 = vpop.f32.mrb[0].mxu0
  %1007 = vmatprep.mubr.f32.mxu0 0.0
  %1008 = vmatmul.mubr.f32.gmra.mrb[0].mxu0 %v852
  %v1009 = vpop.f32.mrb[0].mxu0
  %v1010 = vadd.f32 %v921, %v1009
  %v1011 = vpop.f32.mrb[0].mxu0
  %1012 = vmatprep.mubr.f32.mxu0 0.0
  %1013 = vmatmul.mubr.f32.gmra.mrb[0].mxu0 %v855
  %v1014 = vpop.f32.mrb[0].mxu0
  %v1015 = vadd.f32 %v921, %v1014
  %v1016 = vpop.f32.mrb[0].mxu0
  %1017 = vmatprep.mubr.f32.mxu0 0.0
  %1018 = vmatmul.mubr.f32.gmra.mrb[0].mxu0 %v860
  %v1019 = vpop.f32.mrb[0].mxu0
  %v1020 = vadd.f32 %v921, %v1019
  %v1021 = vpop.f32.mrb[0].mxu0
  %1022 = vmatprep.mubr.f32.mxu0 0.0
  %1023 = vmatmul.mubr.f32.gmra.mrb[0].mxu0 %v863
  %v1024 = vpop.f32.mrb[0].mxu0
  %v1025 = vadd.f32 %v921, %v1024
  %v1026 = vpop.f32.mrb[0].mxu0
  %1027 = vmatprep.mubr.f32.mxu0 0.0
  %1028 = vmatmul.mubr.f32.gmra.mrb[0].mxu0 %v868
  %v1029 = vpop.f32.mrb[0].mxu0
  %v1030 = vadd.f32 %v921, %v1029
  %v1031 = vpop.f32.mrb[0].mxu0
  %1032 = vmatprep.mubr.f32.mxu0 0.0
  %1033 = vmatmul.mubr.f32.gmra.mrb[0].mxu0 %v871
  %v1034 = vpop.f32.mrb[0].mxu0
  %v1035 = vadd.f32 %v921, %v1034
  %v1036 = vpop.f32.mrb[0].mxu0
  %1037 = vmatprep.mubr.f32.mxu0 0.0
  %1038 = vmatmul.mubr.f32.gmra.mrb[0].mxu0 %v876
  %v1039 = vpop.f32.mrb[0].mxu0
  %v1040 = vadd.f32 %v921, %v1039
  %v1041 = vpop.f32.mrb[0].mxu0
  %1042 = vmatprep.mubr.f32.mxu0 0.0
  %1043 = vmatmul.mubr.f32.gmra.mrb[0].mxu0 %v879
  %v1044 = vpop.f32.mrb[0].mxu0
  %v1045 = vadd.f32 %v921, %v1044
  %v1046 = vpop.f32.mrb[0].mxu0
  %1047 = vmatprep.mubr.f32.mxu0 0.0
  %1048 = vmatmul.mubr.f32.gmra.mrb[0].mxu0 %v884
  %v1049 = vpop.f32.mrb[0].mxu0
  %v1050 = vadd.f32 %v921, %v1049
  %v1051 = vpop.f32.mrb[0].mxu0
  %1052 = vmatprep.mubr.f32.mxu0 0.0
  %1053 = vmatmul.mubr.f32.gmra.mrb[0].mxu0 %v887
  %v1054 = vpop.f32.mrb[0].mxu0
  %v1055 = vadd.f32 %v921, %v1054
  %v1056 = vpop.f32.mrb[0].mxu0
  %1057 = vmatprep.mubr.f32.mxu0 0.0
  %1058 = vmatmul.mubr.f32.gmra.mrb[0].mxu0 %v892
  %v1059 = vpop.f32.mrb[0].mxu0
  %v1060 = vadd.f32 %v921, %v1059
  %v1061 = vpop.f32.mrb[0].mxu0
  %1062 = vmatprep.mubr.f32.mxu0 0.0
  %1063 = vmatmul.mubr.f32.gmra.mrb[0].mxu0 %v895
  %v1064 = vpop.f32.mrb[0].mxu0
  %v1065 = vadd.f32 %v921, %v1064
  %v1066 = vpop.f32.mrb[0].mxu0
  %1067 = vdwg.mxu0
  %v1068 = vtanh.pop %v990
  %v1069 = vtanh.pop %v995
  %v1070 = vtanh.pop %v1000
  %v1071 = vtanh.pop %v1005
  %v1072 = vtanh.pop %v1010
  %v1073 = vtanh.pop %v1015
  %v1074 = vtanh.pop %v1020
  %v1075 = vtanh.pop %v1025
  %v1076 = vtanh.pop %v1030
  %v1077 = vtanh.pop %v1035
  %v1078 = vtanh.pop %v1040
  %v1079 = vtanh.pop %v1045
  %v1080 = vtanh.pop %v1050
  %v1081 = vtanh.pop %v1055
  %v1082 = vtanh.pop %v1060
  %v1083 = vtanh.pop %v1065
  %1084 = vst [vmem:[%s8] sm:$0xff] %v1068
  %1085 = vst [vmem:[%s8 + $0x8] sm:$0xff] %v1069
  %1086 = vst [vmem:[%s8 + $0x10] sm:$0xff] %v1070
  %1087 = vst [vmem:[%s8 + $0x18] sm:$0xff] %v1071
  %1088 = vst [vmem:[%s8 + $0x20] sm:$0xff] %v1072
  %1089 = vst [vmem:[%s8 + $0x28] sm:$0xff] %v1073
  %1090 = vst [vmem:[%s8 + $0x30] sm:$0xff] %v1074
  %1091 = vst [vmem:[%s8 + $0x38] sm:$0xff] %v1075
  %1092 = vst [vmem:[%s8 + $0x40] sm:$0xff] %v1076
  %1093 = vst [vmem:[%s8 + $0x48] sm:$0xff] %v1077
  %1094 = vst [vmem:[%s8 + $0x50] sm:$0xff] %v1078
  %1095 = vst [vmem:[%s8 + $0x58] sm:$0xff] %v1079
  %1096 = vst [vmem:[%s8 + $0x60] sm:$0xff] %v1080
  %1097 = vst [vmem:[%s8 + $0x68] sm:$0xff] %v1081
  %1098 = vst [vmem:[%s8 + $0x70] sm:$0xff] %v1082
  %1099 = vst [vmem:[%s8 + $0x78] sm:$0xff] %v1083
  %v1100 = vpack.c.bf16 %v1069, %v1068
  %v1101 = vpack.c.bf16 %v1071, %v1070
  %v1102 = vpack.c.bf16 %v1073, %v1072
  %v1103 = vpack.c.bf16 %v1075, %v1074
  %v1104 = vpack.c.bf16 %v1077, %v1076
  %v1105 = vpack.c.bf16 %v1079, %v1078
  %v1106 = vpack.c.bf16 %v1081, %v1080
  %v1107 = vpack.c.bf16 %v1083, %v1082
  %1108 = vst [vmem:[#allocation2] sm:$0xff] %v1100
  %1109 = vst [vmem:[#allocation2 + $0x8] sm:$0xff] %v1101
  %1110 = vst [vmem:[#allocation2 + $0x10] sm:$0xff] %v1102
  %1111 = vst [vmem:[#allocation2 + $0x18] sm:$0xff] %v1103
  %1112 = vst [vmem:[#allocation2 + $0x20] sm:$0xff] %v1104
  %1113 = vst [vmem:[#allocation2 + $0x28] sm:$0xff] %v1105
  %1114 = vst [vmem:[#allocation2 + $0x30] sm:$0xff] %v1106
  %1115 = vst [vmem:[#allocation2 + $0x38] sm:$0xff] %v1107
  %v1116 = vld [vmem:[#allocation2] sm:$0xff]
  %v1117 = vld [vmem:[#allocation2 + $0x8] sm:$0xff]
  %v1118 = vld [vmem:[#allocation2 + $0x10] sm:$0xff]
  %v1119 = vld [vmem:[#allocation2 + $0x18] sm:$0xff]
  %v1120 = vld [vmem:[#allocation2 + $0x20] sm:$0xff]
  %v1121 = vld [vmem:[#allocation2 + $0x28] sm:$0xff]
  %v1122 = vld [vmem:[#allocation2 + $0x30] sm:$0xff]
  %v1123 = vld [vmem:[#allocation2 + $0x38] sm:$0xff]
  %1124 = vmatprep.subr.bf16.mxu0 0
  %1125 = vmatpush1.bf16.msra.mxu0 %v1116
  %1126 = vmatprep.subr.bf16.mxu0 0
  %1127 = vmatpush1.bf16.msra.mxu0 %v1117
  %1128 = vmatprep.subr.bf16.mxu0 0
  %1129 = vmatpush1.bf16.msra.mxu0 %v1118
  %1130 = vmatprep.subr.bf16.mxu0 0
  %1131 = vmatpush1.bf16.msra.mxu0 %v1119
  %1132 = vmatprep.subr.bf16.mxu0 0
  %1133 = vmatpush1.bf16.msra.mxu0 %v1120
  %1134 = vmatprep.subr.bf16.mxu0 0
  %1135 = vmatpush1.bf16.msra.mxu0 %v1121
  %1136 = vmatprep.subr.bf16.mxu0 0
  %1137 = vmatpush1.bf16.msra.mxu0 %v1122
  %1138 = vmatprep.subr.bf16.mxu0 0
  %1139 = vmatpush1.bf16.msra.mxu0 %v1123
  %1140 = vmatprep.subr.bf16.mxu0 0
  %1141 = vmatpush1.bf16.msra.mxu0 0
  %1142 = vmatprep.subr.bf16.mxu0 0
  %1143 = vmatpush1.bf16.msra.mxu0 0
  %1144 = vmatprep.subr.bf16.mxu0 0
  %1145 = vmatpush1.bf16.msra.mxu0 0
  %1146 = vmatprep.subr.bf16.mxu0 0
  %1147 = vmatpush1.bf16.msra.mxu0 0
  %1148 = vmatprep.subr.bf16.mxu0 0
  %1149 = vmatpush1.bf16.msra.mxu0 0
  %1150 = vmatprep.subr.bf16.mxu0 0
  %1151 = vmatpush1.bf16.msra.mxu0 0
  %1152 = vmatprep.subr.bf16.mxu0 0
  %1153 = vmatpush1.bf16.msra.mxu0 0
  %1154 = vmatprep.subr.bf16.mxu0 0
  %1155 = vmatpush1.bf16.msra.mxu0 0
  %1156 = vmatprep.mubr.bf16.mxu0 0
  %1157 = vmatmul.mubr.bf16.gmra.mrb[0].mxu0 %v94
  %v1158 = vpop.f32.mrb[0].mxu0
  %v1159 = vadd.f32 0.0, %v1158
  %v1160 = vpop.f32.mrb[0].mxu0
  %v1161 = vpop.f32.mrb[0].mxu0
  %v1162 = vadd.f32 0.0, %v1161
  %v1163 = vpop.f32.mrb[0].mxu0
  %1164 = vmatprep.mubr.bf16.mxu0 0
  %1165 = vmatmul.mubr.bf16.gmra.mrb[0].mxu0 %v95
  %v1166 = vpop.f32.mrb[0].mxu0
  %v1167 = vadd.f32 0.0, %v1166
  %v1168 = vpop.f32.mrb[0].mxu0
  %v1169 = vpop.f32.mrb[0].mxu0
  %v1170 = vadd.f32 0.0, %v1169
  %v1171 = vpop.f32.mrb[0].mxu0
  %1172 = vmatprep.mubr.bf16.mxu0 0
  %1173 = vmatmul.mubr.bf16.gmra.mrb[0].mxu0 %v96
  %v1174 = vpop.f32.mrb[0].mxu0
  %v1175 = vadd.f32 0.0, %v1174
  %v1176 = vpop.f32.mrb[0].mxu0
  %v1177 = vpop.f32.mrb[0].mxu0
  %v1178 = vadd.f32 0.0, %v1177
  %v1179 = vpop.f32.mrb[0].mxu0
  %1180 = vmatprep.mubr.bf16.mxu0 0
  %1181 = vmatmul.mubr.bf16.gmra.mrb[0].mxu0 %v97
  %v1182 = vpop.f32.mrb[0].mxu0
  %v1183 = vadd.f32 0.0, %v1182
  %v1184 = vpop.f32.mrb[0].mxu0
  %v1185 = vpop.f32.mrb[0].mxu0
  %v1186 = vadd.f32 0.0, %v1185
  %v1187 = vpop.f32.mrb[0].mxu0
  %1188 = vmatprep.mubr.bf16.mxu0 0
  %1189 = vmatmul.mubr.bf16.gmra.mrb[0].mxu0 %v98
  %v1190 = vpop.f32.mrb[0].mxu0
  %v1191 = vadd.f32 0.0, %v1190
  %v1192 = vpop.f32.mrb[0].mxu0
  %v1193 = vpop.f32.mrb[0].mxu0
  %v1194 = vadd.f32 0.0, %v1193
  %v1195 = vpop.f32.mrb[0].mxu0
  %1196 = vmatprep.mubr.bf16.mxu0 0
  %1197 = vmatmul.mubr.bf16.gmra.mrb[0].mxu0 %v99
  %v1198 = vpop.f32.mrb[0].mxu0
  %v1199 = vadd.f32 0.0, %v1198
  %v1200 = vpop.f32.mrb[0].mxu0
  %v1201 = vpop.f32.mrb[0].mxu0
  %v1202 = vadd.f32 0.0, %v1201
  %v1203 = vpop.f32.mrb[0].mxu0
  %1204 = vmatprep.mubr.bf16.mxu0 0
  %1205 = vmatmul.mubr.bf16.gmra.mrb[0].mxu0 %v100
  %v1206 = vpop.f32.mrb[0].mxu0
  %v1207 = vadd.f32 0.0, %v1206
  %v1208 = vpop.f32.mrb[0].mxu0
  %v1209 = vpop.f32.mrb[0].mxu0
  %v1210 = vadd.f32 0.0, %v1209
  %v1211 = vpop.f32.mrb[0].mxu0
  %1212 = vmatprep.mubr.bf16.mxu0 0
  %1213 = vmatmul.mubr.bf16.gmra.mrb[0].mxu0 %v101
  %v1214 = vpop.f32.mrb[0].mxu0
  %v1215 = vadd.f32 0.0, %v1214
  %v1216 = vpop.f32.mrb[0].mxu0
  %v1217 = vpop.f32.mrb[0].mxu0
  %v1218 = vadd.f32 0.0, %v1217
  %v1219 = vpop.f32.mrb[0].mxu0
  %1220 = vdwg.mxu0
  %s1221 = scalar_lea.vmem %s3, 256
  %v1222 = vld [vmem:[%s1221] sm:$0xff]
  %v1223 = vld [vmem:[%s1221 + $0x8] sm:$0xff]
  %v1224 = vld [vmem:[%s1221 + $0x10] sm:$0xff]
  %v1225 = vld [vmem:[%s1221 + $0x18] sm:$0xff]
  %v1226 = vld [vmem:[%s1221 + $0x20] sm:$0xff]
  %v1227 = vld [vmem:[%s1221 + $0x28] sm:$0xff]
  %v1228 = vld [vmem:[%s1221 + $0x30] sm:$0xff]
  %v1229 = vld [vmem:[%s1221 + $0x38] sm:$0xff]
  %v1230 = vld [vmem:[%s1221 + $0x40] sm:$0xff]
  %v1231 = vld [vmem:[%s1221 + $0x48] sm:$0xff]
  %v1232 = vld [vmem:[%s1221 + $0x50] sm:$0xff]
  %v1233 = vld [vmem:[%s1221 + $0x58] sm:$0xff]
  %v1234 = vld [vmem:[%s1221 + $0x60] sm:$0xff]
  %v1235 = vld [vmem:[%s1221 + $0x68] sm:$0xff]
  %v1236 = vld [vmem:[%s1221 + $0x70] sm:$0xff]
  %v1237 = vld [vmem:[%s1221 + $0x78] sm:$0xff]
  %s1238 = scalar_lea.vmem %s4, 3
  %v1239 = vld [vmem:[%s1238] sm:$0x1]
  %v1241 = vlaneseq
  %v1242 = vshrl.u32 %v1241, 7
  %v1243 = vsub.s32 0, %v1242
  %v1244 = vrot.slane %v1239, %v1243
  %1246 = vmatprep.subr.mxu0 0.0
  %1247 = vmatpush1.msra.mxu0 %v1222
  %1248 = vmatprep.subr.mxu0 0.0
  %1249 = vmatpush1.msra.mxu0 %v1223
  %1250 = vmatprep.subr.mxu0 0.0
  %1251 = vmatpush1.msra.mxu0 %v1224
  %1252 = vmatprep.subr.mxu0 0.0
  %1253 = vmatpush1.msra.mxu0 %v1225
  %1254 = vmatprep.subr.mxu0 0.0
  %1255 = vmatpush1.msra.mxu0 %v1226
  %1256 = vmatprep.subr.mxu0 0.0
  %1257 = vmatpush1.msra.mxu0 %v1227
  %1258 = vmatprep.subr.mxu0 0.0
  %1259 = vmatpush1.msra.mxu0 %v1228
  %1260 = vmatprep.subr.mxu0 0.0
  %1261 = vmatpush1.msra.mxu0 %v1229
  %1262 = vmatprep.subr.mxu0 0.0
  %1263 = vmatpush1.msra.mxu0 %v1230
  %1264 = vmatprep.subr.mxu0 0.0
  %1265 = vmatpush1.msra.mxu0 %v1231
  %1266 = vmatprep.subr.mxu0 0.0
  %1267 = vmatpush1.msra.mxu0 %v1232
  %1268 = vmatprep.subr.mxu0 0.0
  %1269 = vmatpush1.msra.mxu0 %v1233
  %1270 = vmatprep.subr.mxu0 0.0
  %1271 = vmatpush1.msra.mxu0 %v1234
  %1272 = vmatprep.subr.mxu0 0.0
  %1273 = vmatpush1.msra.mxu0 %v1235
  %1274 = vmatprep.subr.mxu0 0.0
  %1275 = vmatpush1.msra.mxu0 %v1236
  %1276 = vmatprep.subr.mxu0 0.0
  %1277 = vmatpush1.msra.mxu0 %v1237
  %1278 = vmatprep.subr.mxu0 0.0
  %1279 = vmatpush1.msra.mxu0 0.0
  %1280 = vmatprep.subr.mxu0 0.0
  %1281 = vmatpush1.msra.mxu0 0.0
  %1282 = vmatprep.subr.mxu0 0.0
  %1283 = vmatpush1.msra.mxu0 0.0
  %1284 = vmatprep.subr.mxu0 0.0
  %1285 = vmatpush1.msra.mxu0 0.0
  %1286 = vmatprep.subr.mxu0 0.0
  %1287 = vmatpush1.msra.mxu0 0.0
  %1288 = vmatprep.subr.mxu0 0.0
  %1289 = vmatpush1.msra.mxu0 0.0
  %1290 = vmatprep.subr.mxu0 0.0
  %1291 = vmatpush1.msra.mxu0 0.0
  %1292 = vmatprep.subr.mxu0 0.0
  %1293 = vmatpush1.msra.mxu0 0.0
  %1294 = vmatprep.subr.mxu0 0.0
  %1295 = vmatpush1.msra.mxu0 0.0
  %1296 = vmatprep.subr.mxu0 0.0
  %1297 = vmatpush1.msra.mxu0 0.0
  %1298 = vmatprep.subr.mxu0 0.0
  %1299 = vmatpush1.msra.mxu0 0.0
  %1300 = vmatprep.subr.mxu0 0.0
  %1301 = vmatpush1.msra.mxu0 0.0
  %1302 = vmatprep.subr.mxu0 0.0
  %1303 = vmatpush1.msra.mxu0 0.0
  %1304 = vmatprep.subr.mxu0 0.0
  %1305 = vmatpush1.msra.mxu0 0.0
  %1306 = vmatprep.subr.mxu0 0.0
  %1307 = vmatpush1.msra.mxu0 0.0
  %1308 = vmatprep.subr.mxu0 0.0
  %1309 = vmatpush1.msra.mxu0 0.0
  %1310 = vmatprep.mubr.f32.mxu0 0.0
  %1311 = vmatmul.mubr.f32.gmra.mrb[0].mxu0 %v1159
  %v1312 = vpop.f32.mrb[0].mxu0
  %v1313 = vadd.f32 %v1244, %v1312
  %v1314 = vpop.f32.mrb[0].mxu0
  %1315 = vmatprep.mubr.f32.mxu0 0.0
  %1316 = vmatmul.mubr.f32.gmra.mrb[0].mxu0 %v1162
  %v1317 = vpop.f32.mrb[0].mxu0
  %v1318 = vadd.f32 %v1244, %v1317
  %v1319 = vpop.f32.mrb[0].mxu0
  %1320 = vmatprep.mubr.f32.mxu0 0.0
  %1321 = vmatmul.mubr.f32.gmra.mrb[0].mxu0 %v1167
  %v1322 = vpop.f32.mrb[0].mxu0
  %v1323 = vadd.f32 %v1244, %v1322
  %v1324 = vpop.f32.mrb[0].mxu0
  %1325 = vmatprep.mubr.f32.mxu0 0.0
  %1326 = vmatmul.mubr.f32.gmra.mrb[0].mxu0 %v1170
  %v1327 = vpop.f32.mrb[0].mxu0
  %v1328 = vadd.f32 %v1244, %v1327
  %v1329 = vpop.f32.mrb[0].mxu0
  %1330 = vmatprep.mubr.f32.mxu0 0.0
  %1331 = vmatmul.mubr.f32.gmra.mrb[0].mxu0 %v1175
  %v1332 = vpop.f32.mrb[0].mxu0
  %v1333 = vadd.f32 %v1244, %v1332
  %v1334 = vpop.f32.mrb[0].mxu0
  %1335 = vmatprep.mubr.f32.mxu0 0.0
  %1336 = vmatmul.mubr.f32.gmra.mrb[0].mxu0 %v1178
  %v1337 = vpop.f32.mrb[0].mxu0
  %v1338 = vadd.f32 %v1244, %v1337
  %v1339 = vpop.f32.mrb[0].mxu0
  %1340 = vmatprep.mubr.f32.mxu0 0.0
  %1341 = vmatmul.mubr.f32.gmra.mrb[0].mxu0 %v1183
  %v1342 = vpop.f32.mrb[0].mxu0
  %v1343 = vadd.f32 %v1244, %v1342
  %v1344 = vpop.f32.mrb[0].mxu0
  %1345 = vmatprep.mubr.f32.mxu0 0.0
  %1346 = vmatmul.mubr.f32.gmra.mrb[0].mxu0 %v1186
  %v1347 = vpop.f32.mrb[0].mxu0
  %v1348 = vadd.f32 %v1244, %v1347
  %v1349 = vpop.f32.mrb[0].mxu0
  %1350 = vmatprep.mubr.f32.mxu0 0.0
  %1351 = vmatmul.mubr.f32.gmra.mrb[0].mxu0 %v1191
  %v1352 = vpop.f32.mrb[0].mxu0
  %v1353 = vadd.f32 %v1244, %v1352
  %v1354 = vpop.f32.mrb[0].mxu0
  %1355 = vmatprep.mubr.f32.mxu0 0.0
  %1356 = vmatmul.mubr.f32.gmra.mrb[0].mxu0 %v1194
  %v1357 = vpop.f32.mrb[0].mxu0
  %v1358 = vadd.f32 %v1244, %v1357
  %v1359 = vpop.f32.mrb[0].mxu0
  %1360 = vmatprep.mubr.f32.mxu0 0.0
  %1361 = vmatmul.mubr.f32.gmra.mrb[0].mxu0 %v1199
  %v1362 = vpop.f32.mrb[0].mxu0
  %v1363 = vadd.f32 %v1244, %v1362
  %v1364 = vpop.f32.mrb[0].mxu0
  %1365 = vmatprep.mubr.f32.mxu0 0.0
  %1366 = vmatmul.mubr.f32.gmra.mrb[0].mxu0 %v1202
  %v1367 = vpop.f32.mrb[0].mxu0
  %v1368 = vadd.f32 %v1244, %v1367
  %v1369 = vpop.f32.mrb[0].mxu0
  %1370 = vmatprep.mubr.f32.mxu0 0.0
  %1371 = vmatmul.mubr.f32.gmra.mrb[0].mxu0 %v1207
  %v1372 = vpop.f32.mrb[0].mxu0
  %v1373 = vadd.f32 %v1244, %v1372
  %v1374 = vpop.f32.mrb[0].mxu0
  %1375 = vmatprep.mubr.f32.mxu0 0.0
  %1376 = vmatmul.mubr.f32.gmra.mrb[0].mxu0 %v1210
  %v1377 = vpop.f32.mrb[0].mxu0
  %v1378 = vadd.f32 %v1244, %v1377
  %v1379 = vpop.f32.mrb[0].mxu0
  %1380 = vmatprep.mubr.f32.mxu0 0.0
  %1381 = vmatmul.mubr.f32.gmra.mrb[0].mxu0 %v1215
  %v1382 = vpop.f32.mrb[0].mxu0
  %v1383 = vadd.f32 %v1244, %v1382
  %v1384 = vpop.f32.mrb[0].mxu0
  %1385 = vmatprep.mubr.f32.mxu0 0.0
  %1386 = vmatmul.mubr.f32.gmra.mrb[0].mxu0 %v1218
  %v1387 = vpop.f32.mrb[0].mxu0
  %v1388 = vadd.f32 %v1244, %v1387
  %v1389 = vpop.f32.mrb[0].mxu0
  %1390 = vdwg.mxu0
  %v1391 = vtanh.pop %v1313
  %v1392 = vtanh.pop %v1318
  %v1393 = vtanh.pop %v1323
  %v1394 = vtanh.pop %v1328
  %v1395 = vtanh.pop %v1333
  %v1396 = vtanh.pop %v1338
  %v1397 = vtanh.pop %v1343
  %v1398 = vtanh.pop %v1348
  %v1399 = vtanh.pop %v1353
  %v1400 = vtanh.pop %v1358
  %v1401 = vtanh.pop %v1363
  %v1402 = vtanh.pop %v1368
  %v1403 = vtanh.pop %v1373
  %v1404 = vtanh.pop %v1378
  %v1405 = vtanh.pop %v1383
  %v1406 = vtanh.pop %v1388
  %1407 = vst [vmem:[%s9] sm:$0xff] %v1391
  %1408 = vst [vmem:[%s9 + $0x8] sm:$0xff] %v1392
  %1409 = vst [vmem:[%s9 + $0x10] sm:$0xff] %v1393
  %1410 = vst [vmem:[%s9 + $0x18] sm:$0xff] %v1394
  %1411 = vst [vmem:[%s9 + $0x20] sm:$0xff] %v1395
  %1412 = vst [vmem:[%s9 + $0x28] sm:$0xff] %v1396
  %1413 = vst [vmem:[%s9 + $0x30] sm:$0xff] %v1397
  %1414 = vst [vmem:[%s9 + $0x38] sm:$0xff] %v1398
  %1415 = vst [vmem:[%s9 + $0x40] sm:$0xff] %v1399
  %1416 = vst [vmem:[%s9 + $0x48] sm:$0xff] %v1400
  %1417 = vst [vmem:[%s9 + $0x50] sm:$0xff] %v1401
  %1418 = vst [vmem:[%s9 + $0x58] sm:$0xff] %v1402
  %1419 = vst [vmem:[%s9 + $0x60] sm:$0xff] %v1403
  %1420 = vst [vmem:[%s9 + $0x68] sm:$0xff] %v1404
  %1421 = vst [vmem:[%s9 + $0x70] sm:$0xff] %v1405
  %1422 = vst [vmem:[%s9 + $0x78] sm:$0xff] %v1406
  %v1423 = vpack.c.bf16 %v1392, %v1391
  %v1424 = vpack.c.bf16 %v1394, %v1393
  %v1425 = vpack.c.bf16 %v1396, %v1395
  %v1426 = vpack.c.bf16 %v1398, %v1397
  %v1427 = vpack.c.bf16 %v1400, %v1399
  %v1428 = vpack.c.bf16 %v1402, %v1401
  %v1429 = vpack.c.bf16 %v1404, %v1403
  %v1430 = vpack.c.bf16 %v1406, %v1405
  %1431 = vst [vmem:[#allocation2] sm:$0xff] %v1423
  %1432 = vst [vmem:[#allocation2 + $0x8] sm:$0xff] %v1424
  %1433 = vst [vmem:[#allocation2 + $0x10] sm:$0xff] %v1425
  %1434 = vst [vmem:[#allocation2 + $0x18] sm:$0xff] %v1426
  %1435 = vst [vmem:[#allocation2 + $0x20] sm:$0xff] %v1427
  %1436 = vst [vmem:[#allocation2 + $0x28] sm:$0xff] %v1428
  %1437 = vst [vmem:[#allocation2 + $0x30] sm:$0xff] %v1429
  %1438 = vst [vmem:[#allocation2 + $0x38] sm:$0xff] %v1430
  %v1439 = vld [vmem:[#allocation2] sm:$0xff]
  %v1440 = vld [vmem:[#allocation2 + $0x8] sm:$0xff]
  %v1441 = vld [vmem:[#allocation2 + $0x10] sm:$0xff]
  %v1442 = vld [vmem:[#allocation2 + $0x18] sm:$0xff]
  %v1443 = vld [vmem:[#allocation2 + $0x20] sm:$0xff]
  %v1444 = vld [vmem:[#allocation2 + $0x28] sm:$0xff]
  %v1445 = vld [vmem:[#allocation2 + $0x30] sm:$0xff]
  %v1446 = vld [vmem:[#allocation2 + $0x38] sm:$0xff]
  %1447 = vmatprep.subr.bf16.mxu0 0
  %1448 = vmatpush1.bf16.msra.mxu0 %v1439
  %1449 = vmatprep.subr.bf16.mxu0 0
  %1450 = vmatpush1.bf16.msra.mxu0 %v1440
  %1451 = vmatprep.subr.bf16.mxu0 0
  %1452 = vmatpush1.bf16.msra.mxu0 %v1441
  %1453 = vmatprep.subr.bf16.mxu0 0
  %1454 = vmatpush1.bf16.msra.mxu0 %v1442
  %1455 = vmatprep.subr.bf16.mxu0 0
  %1456 = vmatpush1.bf16.msra.mxu0 %v1443
  %1457 = vmatprep.subr.bf16.mxu0 0
  %1458 = vmatpush1.bf16.msra.mxu0 %v1444
  %1459 = vmatprep.subr.bf16.mxu0 0
  %1460 = vmatpush1.bf16.msra.mxu0 %v1445
  %1461 = vmatprep.subr.bf16.mxu0 0
  %1462 = vmatpush1.bf16.msra.mxu0 %v1446
  %1463 = vmatprep.subr.bf16.mxu0 0
  %1464 = vmatpush1.bf16.msra.mxu0 0
  %1465 = vmatprep.subr.bf16.mxu0 0
  %1466 = vmatpush1.bf16.msra.mxu0 0
  %1467 = vmatprep.subr.bf16.mxu0 0
  %1468 = vmatpush1.bf16.msra.mxu0 0
  %1469 = vmatprep.subr.bf16.mxu0 0
  %1470 = vmatpush1.bf16.msra.mxu0 0
  %1471 = vmatprep.subr.bf16.mxu0 0
  %1472 = vmatpush1.bf16.msra.mxu0 0
  %1473 = vmatprep.subr.bf16.mxu0 0
  %1474 = vmatpush1.bf16.msra.mxu0 0
  %1475 = vmatprep.subr.bf16.mxu0 0
  %1476 = vmatpush1.bf16.msra.mxu0 0
  %1477 = vmatprep.subr.bf16.mxu0 0
  %1478 = vmatpush1.bf16.msra.mxu0 0
  %1479 = vmatprep.mubr.bf16.mxu0 0
  %1480 = vmatmul.mubr.bf16.gmra.mrb[0].mxu0 %v94
  %v1481 = vpop.f32.mrb[0].mxu0
  %v1482 = vadd.f32 0.0, %v1481
  %v1483 = vpop.f32.mrb[0].mxu0
  %v1484 = vpop.f32.mrb[0].mxu0
  %v1485 = vadd.f32 0.0, %v1484
  %v1486 = vpop.f32.mrb[0].mxu0
  %1487 = vmatprep.mubr.bf16.mxu0 0
  %1488 = vmatmul.mubr.bf16.gmra.mrb[0].mxu0 %v95
  %v1489 = vpop.f32.mrb[0].mxu0
  %v1490 = vadd.f32 0.0, %v1489
  %v1491 = vpop.f32.mrb[0].mxu0
  %v1492 = vpop.f32.mrb[0].mxu0
  %v1493 = vadd.f32 0.0, %v1492
  %v1494 = vpop.f32.mrb[0].mxu0
  %1495 = vmatprep.mubr.bf16.mxu0 0
  %1496 = vmatmul.mubr.bf16.gmra.mrb[0].mxu0 %v96
  %v1497 = vpop.f32.mrb[0].mxu0
  %v1498 = vadd.f32 0.0, %v1497
  %v1499 = vpop.f32.mrb[0].mxu0
  %v1500 = vpop.f32.mrb[0].mxu0
  %v1501 = vadd.f32 0.0, %v1500
  %v1502 = vpop.f32.mrb[0].mxu0
  %1503 = vmatprep.mubr.bf16.mxu0 0
  %1504 = vmatmul.mubr.bf16.gmra.mrb[0].mxu0 %v97
  %v1505 = vpop.f32.mrb[0].mxu0
  %v1506 = vadd.f32 0.0, %v1505
  %v1507 = vpop.f32.mrb[0].mxu0
  %v1508 = vpop.f32.mrb[0].mxu0
  %v1509 = vadd.f32 0.0, %v1508
  %v1510 = vpop.f32.mrb[0].mxu0
  %1511 = vmatprep.mubr.bf16.mxu0 0
  %1512 = vmatmul.mubr.bf16.gmra.mrb[0].mxu0 %v98
  %v1513 = vpop.f32.mrb[0].mxu0
  %v1514 = vadd.f32 0.0, %v1513
  %v1515 = vpop.f32.mrb[0].mxu0
  %v1516 = vpop.f32.mrb[0].mxu0
  %v1517 = vadd.f32 0.0, %v1516
  %v1518 = vpop.f32.mrb[0].mxu0
  %1519 = vmatprep.mubr.bf16.mxu0 0
  %1520 = vmatmul.mubr.bf16.gmra.mrb[0].mxu0 %v99
  %v1521 = vpop.f32.mrb[0].mxu0
  %v1522 = vadd.f32 0.0, %v1521
  %v1523 = vpop.f32.mrb[0].mxu0
  %v1524 = vpop.f32.mrb[0].mxu0
  %v1525 = vadd.f32 0.0, %v1524
  %v1526 = vpop.f32.mrb[0].mxu0
  %1527 = vmatprep.mubr.bf16.mxu0 0
  %1528 = vmatmul.mubr.bf16.gmra.mrb[0].mxu0 %v100
  %v1529 = vpop.f32.mrb[0].mxu0
  %v1530 = vadd.f32 0.0, %v1529
  %v1531 = vpop.f32.mrb[0].mxu0
  %v1532 = vpop.f32.mrb[0].mxu0
  %v1533 = vadd.f32 0.0, %v1532
  %v1534 = vpop.f32.mrb[0].mxu0
  %1535 = vmatprep.mubr.bf16.mxu0 0
  %1536 = vmatmul.mubr.bf16.gmra.mrb[0].mxu0 %v101
  %v1537 = vpop.f32.mrb[0].mxu0
  %v1538 = vadd.f32 0.0, %v1537
  %v1539 = vpop.f32.mrb[0].mxu0
  %v1540 = vpop.f32.mrb[0].mxu0
  %v1541 = vadd.f32 0.0, %v1540
  %v1542 = vpop.f32.mrb[0].mxu0
  %1543 = vdwg.mxu0
  %s1544 = scalar_lea.vmem %s3, 384
  %v1545 = vld [vmem:[%s1544] sm:$0xff]
  %v1546 = vld [vmem:[%s1544 + $0x8] sm:$0xff]
  %v1547 = vld [vmem:[%s1544 + $0x10] sm:$0xff]
  %v1548 = vld [vmem:[%s1544 + $0x18] sm:$0xff]
  %v1549 = vld [vmem:[%s1544 + $0x20] sm:$0xff]
  %v1550 = vld [vmem:[%s1544 + $0x28] sm:$0xff]
  %v1551 = vld [vmem:[%s1544 + $0x30] sm:$0xff]
  %v1552 = vld [vmem:[%s1544 + $0x38] sm:$0xff]
  %v1553 = vld [vmem:[%s1544 + $0x40] sm:$0xff]
  %v1554 = vld [vmem:[%s1544 + $0x48] sm:$0xff]
  %v1555 = vld [vmem:[%s1544 + $0x50] sm:$0xff]
  %v1556 = vld [vmem:[%s1544 + $0x58] sm:$0xff]
  %v1557 = vld [vmem:[%s1544 + $0x60] sm:$0xff]
  %v1558 = vld [vmem:[%s1544 + $0x68] sm:$0xff]
  %v1559 = vld [vmem:[%s1544 + $0x70] sm:$0xff]
  %v1560 = vld [vmem:[%s1544 + $0x78] sm:$0xff]
  %s1561 = scalar_lea.vmem %s4, 4
  %v1562 = vld [vmem:[%s1561] sm:$0x1]
  %v1564 = vlaneseq
  %v1565 = vshrl.u32 %v1564, 7
  %v1566 = vsub.s32 0, %v1565
  %v1567 = vrot.slane %v1562, %v1566
  %1569 = vmatprep.subr.mxu0 0.0
  %1570 = vmatpush1.msra.mxu0 %v1545
  %1571 = vmatprep.subr.mxu0 0.0
  %1572 = vmatpush1.msra.mxu0 %v1546
  %1573 = vmatprep.subr.mxu0 0.0
  %1574 = vmatpush1.msra.mxu0 %v1547
  %1575 = vmatprep.subr.mxu0 0.0
  %1576 = vmatpush1.msra.mxu0 %v1548
  %1577 = vmatprep.subr.mxu0 0.0
  %1578 = vmatpush1.msra.mxu0 %v1549
  %1579 = vmatprep.subr.mxu0 0.0
  %1580 = vmatpush1.msra.mxu0 %v1550
  %1581 = vmatprep.subr.mxu0 0.0
  %1582 = vmatpush1.msra.mxu0 %v1551
  %1583 = vmatprep.subr.mxu0 0.0
  %1584 = vmatpush1.msra.mxu0 %v1552
  %1585 = vmatprep.subr.mxu0 0.0
  %1586 = vmatpush1.msra.mxu0 %v1553
  %1587 = vmatprep.subr.mxu0 0.0
  %1588 = vmatpush1.msra.mxu0 %v1554
  %1589 = vmatprep.subr.mxu0 0.0
  %1590 = vmatpush1.msra.mxu0 %v1555
  %1591 = vmatprep.subr.mxu0 0.0
  %1592 = vmatpush1.msra.mxu0 %v1556
  %1593 = vmatprep.subr.mxu0 0.0
  %1594 = vmatpush1.msra.mxu0 %v1557
  %1595 = vmatprep.subr.mxu0 0.0
  %1596 = vmatpush1.msra.mxu0 %v1558
  %1597 = vmatprep.subr.mxu0 0.0
  %1598 = vmatpush1.msra.mxu0 %v1559
  %1599 = vmatprep.subr.mxu0 0.0
  %1600 = vmatpush1.msra.mxu0 %v1560
  %1601 = vmatprep.subr.mxu0 0.0
  %1602 = vmatpush1.msra.mxu0 0.0
  %1603 = vmatprep.subr.mxu0 0.0
  %1604 = vmatpush1.msra.mxu0 0.0
  %1605 = vmatprep.subr.mxu0 0.0
  %1606 = vmatpush1.msra.mxu0 0.0
  %1607 = vmatprep.subr.mxu0 0.0
  %1608 = vmatpush1.msra.mxu0 0.0
  %1609 = vmatprep.subr.mxu0 0.0
  %1610 = vmatpush1.msra.mxu0 0.0
  %1611 = vmatprep.subr.mxu0 0.0
  %1612 = vmatpush1.msra.mxu0 0.0
  %1613 = vmatprep.subr.mxu0 0.0
  %1614 = vmatpush1.msra.mxu0 0.0
  %1615 = vmatprep.subr.mxu0 0.0
  %1616 = vmatpush1.msra.mxu0 0.0
  %1617 = vmatprep.subr.mxu0 0.0
  %1618 = vmatpush1.msra.mxu0 0.0
  %1619 = vmatprep.subr.mxu0 0.0
  %1620 = vmatpush1.msra.mxu0 0.0
  %1621 = vmatprep.subr.mxu0 0.0
  %1622 = vmatpush1.msra.mxu0 0.0
  %1623 = vmatprep.subr.mxu0 0.0
  %1624 = vmatpush1.msra.mxu0 0.0
  %1625 = vmatprep.subr.mxu0 0.0
  %1626 = vmatpush1.msra.mxu0 0.0
  %1627 = vmatprep.subr.mxu0 0.0
  %1628 = vmatpush1.msra.mxu0 0.0
  %1629 = vmatprep.subr.mxu0 0.0
  %1630 = vmatpush1.msra.mxu0 0.0
  %1631 = vmatprep.subr.mxu0 0.0
  %1632 = vmatpush1.msra.mxu0 0.0
  %1633 = vmatprep.mubr.f32.mxu0 0.0
  %1634 = vmatmul.mubr.f32.gmra.mrb[0].mxu0 %v1482
  %v1635 = vpop.f32.mrb[0].mxu0
  %v1636 = vadd.f32 %v1567, %v1635
  %v1637 = vpop.f32.mrb[0].mxu0
  %1638 = vmatprep.mubr.f32.mxu0 0.0
  %1639 = vmatmul.mubr.f32.gmra.mrb[0].mxu0 %v1485
  %v1640 = vpop.f32.mrb[0].mxu0
  %v1641 = vadd.f32 %v1567, %v1640
  %v1642 = vpop.f32.mrb[0].mxu0
  %1643 = vmatprep.mubr.f32.mxu0 0.0
  %1644 = vmatmul.mubr.f32.gmra.mrb[0].mxu0 %v1490
  %v1645 = vpop.f32.mrb[0].mxu0
  %v1646 = vadd.f32 %v1567, %v1645
  %v1647 = vpop.f32.mrb[0].mxu0
  %1648 = vmatprep.mubr.f32.mxu0 0.0
  %1649 = vmatmul.mubr.f32.gmra.mrb[0].mxu0 %v1493
  %v1650 = vpop.f32.mrb[0].mxu0
  %v1651 = vadd.f32 %v1567, %v1650
  %v1652 = vpop.f32.mrb[0].mxu0
  %1653 = vmatprep.mubr.f32.mxu0 0.0
  %1654 = vmatmul.mubr.f32.gmra.mrb[0].mxu0 %v1498
  %v1655 = vpop.f32.mrb[0].mxu0
  %v1656 = vadd.f32 %v1567, %v1655
  %v1657 = vpop.f32.mrb[0].mxu0
  %1658 = vmatprep.mubr.f32.mxu0 0.0
  %1659 = vmatmul.mubr.f32.gmra.mrb[0].mxu0 %v1501
  %v1660 = vpop.f32.mrb[0].mxu0
  %v1661 = vadd.f32 %v1567, %v1660
  %v1662 = vpop.f32.mrb[0].mxu0
  %1663 = vmatprep.mubr.f32.mxu0 0.0
  %1664 = vmatmul.mubr.f32.gmra.mrb[0].mxu0 %v1506
  %v1665 = vpop.f32.mrb[0].mxu0
  %v1666 = vadd.f32 %v1567, %v1665
  %v1667 = vpop.f32.mrb[0].mxu0
  %1668 = vmatprep.mubr.f32.mxu0 0.0
  %1669 = vmatmul.mubr.f32.gmra.mrb[0].mxu0 %v1509
  %v1670 = vpop.f32.mrb[0].mxu0
  %v1671 = vadd.f32 %v1567, %v1670
  %v1672 = vpop.f32.mrb[0].mxu0
  %1673 = vmatprep.mubr.f32.mxu0 0.0
  %1674 = vmatmul.mubr.f32.gmra.mrb[0].mxu0 %v1514
  %v1675 = vpop.f32.mrb[0].mxu0
  %v1676 = vadd.f32 %v1567, %v1675
  %v1677 = vpop.f32.mrb[0].mxu0
  %1678 = vmatprep.mubr.f32.mxu0 0.0
  %1679 = vmatmul.mubr.f32.gmra.mrb[0].mxu0 %v1517
  %v1680 = vpop.f32.mrb[0].mxu0
  %v1681 = vadd.f32 %v1567, %v1680
  %v1682 = vpop.f32.mrb[0].mxu0
  %1683 = vmatprep.mubr.f32.mxu0 0.0
  %1684 = vmatmul.mubr.f32.gmra.mrb[0].mxu0 %v1522
  %v1685 = vpop.f32.mrb[0].mxu0
  %v1686 = vadd.f32 %v1567, %v1685
  %v1687 = vpop.f32.mrb[0].mxu0
  %1688 = vmatprep.mubr.f32.mxu0 0.0
  %1689 = vmatmul.mubr.f32.gmra.mrb[0].mxu0 %v1525
  %v1690 = vpop.f32.mrb[0].mxu0
  %v1691 = vadd.f32 %v1567, %v1690
  %v1692 = vpop.f32.mrb[0].mxu0
  %1693 = vmatprep.mubr.f32.mxu0 0.0
  %1694 = vmatmul.mubr.f32.gmra.mrb[0].mxu0 %v1530
  %v1695 = vpop.f32.mrb[0].mxu0
  %v1696 = vadd.f32 %v1567, %v1695
  %v1697 = vpop.f32.mrb[0].mxu0
  %1698 = vmatprep.mubr.f32.mxu0 0.0
  %1699 = vmatmul.mubr.f32.gmra.mrb[0].mxu0 %v1533
  %v1700 = vpop.f32.mrb[0].mxu0
  %v1701 = vadd.f32 %v1567, %v1700
  %v1702 = vpop.f32.mrb[0].mxu0
  %1703 = vmatprep.mubr.f32.mxu0 0.0
  %1704 = vmatmul.mubr.f32.gmra.mrb[0].mxu0 %v1538
  %v1705 = vpop.f32.mrb[0].mxu0
  %v1706 = vadd.f32 %v1567, %v1705
  %v1707 = vpop.f32.mrb[0].mxu0
  %1708 = vmatprep.mubr.f32.mxu0 0.0
  %1709 = vmatmul.mubr.f32.gmra.mrb[0].mxu0 %v1541
  %v1710 = vpop.f32.mrb[0].mxu0
  %v1711 = vadd.f32 %v1567, %v1710
  %v1712 = vpop.f32.mrb[0].mxu0
  %1713 = vdwg.mxu0
  %v1714 = vtanh.pop %v1636
  %v1715 = vtanh.pop %v1641
  %v1716 = vtanh.pop %v1646
  %v1717 = vtanh.pop %v1651
  %v1718 = vtanh.pop %v1656
  %v1719 = vtanh.pop %v1661
  %v1720 = vtanh.pop %v1666
  %v1721 = vtanh.pop %v1671
  %v1722 = vtanh.pop %v1676
  %v1723 = vtanh.pop %v1681
  %v1724 = vtanh.pop %v1686
  %v1725 = vtanh.pop %v1691
  %v1726 = vtanh.pop %v1696
  %v1727 = vtanh.pop %v1701
  %v1728 = vtanh.pop %v1706
  %v1729 = vtanh.pop %v1711
  %1730 = vst [vmem:[%s10] sm:$0xff] %v1714
  %1731 = vst [vmem:[%s10 + $0x8] sm:$0xff] %v1715
  %1732 = vst [vmem:[%s10 + $0x10] sm:$0xff] %v1716
  %1733 = vst [vmem:[%s10 + $0x18] sm:$0xff] %v1717
  %1734 = vst [vmem:[%s10 + $0x20] sm:$0xff] %v1718
  %1735 = vst [vmem:[%s10 + $0x28] sm:$0xff] %v1719
  %1736 = vst [vmem:[%s10 + $0x30] sm:$0xff] %v1720
  %1737 = vst [vmem:[%s10 + $0x38] sm:$0xff] %v1721
  %1738 = vst [vmem:[%s10 + $0x40] sm:$0xff] %v1722
  %1739 = vst [vmem:[%s10 + $0x48] sm:$0xff] %v1723
  %1740 = vst [vmem:[%s10 + $0x50] sm:$0xff] %v1724
  %1741 = vst [vmem:[%s10 + $0x58] sm:$0xff] %v1725
  %1742 = vst [vmem:[%s10 + $0x60] sm:$0xff] %v1726
  %1743 = vst [vmem:[%s10 + $0x68] sm:$0xff] %v1727
  %1744 = vst [vmem:[%s10 + $0x70] sm:$0xff] %v1728
  %1745 = vst [vmem:[%s10 + $0x78] sm:$0xff] %v1729
  %v1746 = vpack.c.bf16 %v1715, %v1714
  %v1747 = vpack.c.bf16 %v1717, %v1716
  %v1748 = vpack.c.bf16 %v1719, %v1718
  %v1749 = vpack.c.bf16 %v1721, %v1720
  %v1750 = vpack.c.bf16 %v1723, %v1722
  %v1751 = vpack.c.bf16 %v1725, %v1724
  %v1752 = vpack.c.bf16 %v1727, %v1726
  %v1753 = vpack.c.bf16 %v1729, %v1728
  %1754 = vst [vmem:[#allocation2] sm:$0xff] %v1746
  %1755 = vst [vmem:[#allocation2 + $0x8] sm:$0xff] %v1747
  %1756 = vst [vmem:[#allocation2 + $0x10] sm:$0xff] %v1748
  %1757 = vst [vmem:[#allocation2 + $0x18] sm:$0xff] %v1749
  %1758 = vst [vmem:[#allocation2 + $0x20] sm:$0xff] %v1750
  %1759 = vst [vmem:[#allocation2 + $0x28] sm:$0xff] %v1751
  %1760 = vst [vmem:[#allocation2 + $0x30] sm:$0xff] %v1752
  %1761 = vst [vmem:[#allocation2 + $0x38] sm:$0xff] %v1753
  %v1762 = vld [vmem:[#allocation2] sm:$0xff]
  %v1763 = vld [vmem:[#allocation2 + $0x8] sm:$0xff]
  %v1764 = vld [vmem:[#allocation2 + $0x10] sm:$0xff]
  %v1765 = vld [vmem:[#allocation2 + $0x18] sm:$0xff]
  %v1766 = vld [vmem:[#allocation2 + $0x20] sm:$0xff]
  %v1767 = vld [vmem:[#allocation2 + $0x28] sm:$0xff]
  %v1768 = vld [vmem:[#allocation2 + $0x30] sm:$0xff]
  %v1769 = vld [vmem:[#allocation2 + $0x38] sm:$0xff]
  %v1770 = vld [vmem:[%s5] sm:$0xf]
  %v1771 = vld [vmem:[%s5 + $0x4] sm:$0xf]
  %v1772 = vld [vmem:[%s5 + $0x8] sm:$0xf]
  %v1773 = vld [vmem:[%s5 + $0xc] sm:$0xf]
  %v1774 = vld [vmem:[%s5 + $0x10] sm:$0xf]
  %v1775 = vld [vmem:[%s5 + $0x14] sm:$0xf]
  %v1776 = vld [vmem:[%s5 + $0x18] sm:$0xf]
  %v1777 = vld [vmem:[%s5 + $0x1c] sm:$0xf]
  %v1778 = vld [vmem:[%s5 + $0x20] sm:$0xf]
  %v1779 = vld [vmem:[%s5 + $0x24] sm:$0xf]
  %v1780 = vld [vmem:[%s5 + $0x28] sm:$0xf]
  %v1781 = vld [vmem:[%s5 + $0x2c] sm:$0xf]
  %v1782 = vld [vmem:[%s5 + $0x30] sm:$0xf]
  %v1783 = vld [vmem:[%s5 + $0x34] sm:$0xf]
  %v1784 = vld [vmem:[%s5 + $0x38] sm:$0xf]
  %v1785 = vld [vmem:[%s5 + $0x3c] sm:$0xf]
  %v1802 = vunpack.c.l.b16 %v1770
  %v1803 = vunpack.c.l.b16 %v1771
  %v1804 = vunpack.c.l.b16 %v1772
  %v1805 = vunpack.c.l.b16 %v1773
  %v1806 = vunpack.c.l.b16 %v1774
  %v1807 = vunpack.c.l.b16 %v1775
  %v1808 = vunpack.c.l.b16 %v1776
  %v1809 = vunpack.c.l.b16 %v1777
  %v1810 = vunpack.c.l.b16 %v1778
  %v1811 = vunpack.c.l.b16 %v1779
  %v1812 = vunpack.c.l.b16 %v1780
  %v1813 = vunpack.c.l.b16 %v1781
  %v1814 = vunpack.c.l.b16 %v1782
  %v1815 = vunpack.c.l.b16 %v1783
  %v1816 = vunpack.c.l.b16 %v1784
  %v1817 = vunpack.c.l.b16 %v1785
  %v1818 = vpack.c.b16 %v1803, %v1802
  %v1819 = vpack.c.b16 %v1805, %v1804
  %v1820 = vpack.c.b16 %v1807, %v1806
  %v1821 = vpack.c.b16 %v1809, %v1808
  %v1822 = vpack.c.b16 %v1811, %v1810
  %v1823 = vpack.c.b16 %v1813, %v1812
  %v1824 = vpack.c.b16 %v1815, %v1814
  %v1825 = vpack.c.b16 %v1817, %v1816
  %1834 = vmatprep.subr.bf16.mxu0 0
  %1835 = vmatpush1.bf16.msra.mxu0 %v1818
  %1836 = vmatprep.subr.bf16.mxu0 0
  %1837 = vmatpush1.bf16.msra.mxu0 %v1819
  %1838 = vmatprep.subr.bf16.mxu0 0
  %1839 = vmatpush1.bf16.msra.mxu0 %v1820
  %1840 = vmatprep.subr.bf16.mxu0 0
  %1841 = vmatpush1.bf16.msra.mxu0 %v1821
  %1842 = vmatprep.subr.bf16.mxu0 0
  %1843 = vmatpush1.bf16.msra.mxu0 %v1822
  %1844 = vmatprep.subr.bf16.mxu0 0
  %1845 = vmatpush1.bf16.msra.mxu0 %v1823
  %1846 = vmatprep.subr.bf16.mxu0 0
  %1847 = vmatpush1.bf16.msra.mxu0 %v1824
  %1848 = vmatprep.subr.bf16.mxu0 0
  %1849 = vmatpush1.bf16.msra.mxu0 %v1825
  %1850 = vmatprep.subr.bf16.mxu0 0
  %1851 = vmatpush1.bf16.msra.mxu0 0
  %1852 = vmatprep.subr.bf16.mxu0 0
  %1853 = vmatpush1.bf16.msra.mxu0 0
  %1854 = vmatprep.subr.bf16.mxu0 0
  %1855 = vmatpush1.bf16.msra.mxu0 0
  %1856 = vmatprep.subr.bf16.mxu0 0
  %1857 = vmatpush1.bf16.msra.mxu0 0
  %1858 = vmatprep.subr.bf16.mxu0 0
  %1859 = vmatpush1.bf16.msra.mxu0 0
  %1860 = vmatprep.subr.bf16.mxu0 0
  %1861 = vmatpush1.bf16.msra.mxu0 0
  %1862 = vmatprep.subr.bf16.mxu0 0
  %1863 = vmatpush1.bf16.msra.mxu0 0
  %1864 = vmatprep.subr.bf16.mxu0 0
  %1865 = vmatpush1.bf16.msra.mxu0 0
  %1866 = vmatprep.mubr.bf16.mxu0 0
  %1867 = vmatmul.mubr.bf16.gmra.mrb[0].mxu0 %v1762
  %v1868 = vpop.f32.mrb[0].mxu0
  %v1869 = vadd.f32 0.0, %v1868
  %v1870 = vpop.f32.mrb[0].mxu0
  %v1871 = vpop.f32.mrb[0].mxu0
  %v1872 = vadd.f32 0.0, %v1871
  %v1873 = vpop.f32.mrb[0].mxu0
  %1874 = vmatprep.mubr.bf16.mxu0 0
  %1875 = vmatmul.mubr.bf16.gmra.mrb[0].mxu0 %v1763
  %v1876 = vpop.f32.mrb[0].mxu0
  %v1877 = vadd.f32 0.0, %v1876
  %v1878 = vpop.f32.mrb[0].mxu0
  %v1879 = vpop.f32.mrb[0].mxu0
  %v1880 = vadd.f32 0.0, %v1879
  %v1881 = vpop.f32.mrb[0].mxu0
  %1882 = vmatprep.mubr.bf16.mxu0 0
  %1883 = vmatmul.mubr.bf16.gmra.mrb[0].mxu0 %v1764
  %v1884 = vpop.f32.mrb[0].mxu0
  %v1885 = vadd.f32 0.0, %v1884
  %v1886 = vpop.f32.mrb[0].mxu0
  %v1887 = vpop.f32.mrb[0].mxu0
  %v1888 = vadd.f32 0.0, %v1887
  %v1889 = vpop.f32.mrb[0].mxu0
  %1890 = vmatprep.mubr.bf16.mxu0 0
  %1891 = vmatmul.mubr.bf16.gmra.mrb[0].mxu0 %v1765
  %v1892 = vpop.f32.mrb[0].mxu0
  %v1893 = vadd.f32 0.0, %v1892
  %v1894 = vpop.f32.mrb[0].mxu0
  %v1895 = vpop.f32.mrb[0].mxu0
  %v1896 = vadd.f32 0.0, %v1895
  %v1897 = vpop.f32.mrb[0].mxu0
  %1898 = vmatprep.mubr.bf16.mxu0 0
  %1899 = vmatmul.mubr.bf16.gmra.mrb[0].mxu0 %v1766
  %v1900 = vpop.f32.mrb[0].mxu0
  %v1901 = vadd.f32 0.0, %v1900
  %v1902 = vpop.f32.mrb[0].mxu0
  %v1903 = vpop.f32.mrb[0].mxu0
  %v1904 = vadd.f32 0.0, %v1903
  %v1905 = vpop.f32.mrb[0].mxu0
  %1906 = vmatprep.mubr.bf16.mxu0 0
  %1907 = vmatmul.mubr.bf16.gmra.mrb[0].mxu0 %v1767
  %v1908 = vpop.f32.mrb[0].mxu0
  %v1909 = vadd.f32 0.0, %v1908
  %v1910 = vpop.f32.mrb[0].mxu0
  %v1911 = vpop.f32.mrb[0].mxu0
  %v1912 = vadd.f32 0.0, %v1911
  %v1913 = vpop.f32.mrb[0].mxu0
  %1914 = vmatprep.mubr.bf16.mxu0 0
  %1915 = vmatmul.mubr.bf16.gmra.mrb[0].mxu0 %v1768
  %v1916 = vpop.f32.mrb[0].mxu0
  %v1917 = vadd.f32 0.0, %v1916
  %v1918 = vpop.f32.mrb[0].mxu0
  %v1919 = vpop.f32.mrb[0].mxu0
  %v1920 = vadd.f32 0.0, %v1919
  %v1921 = vpop.f32.mrb[0].mxu0
  %1922 = vmatprep.mubr.bf16.mxu0 0
  %1923 = vmatmul.mubr.bf16.gmra.mrb[0].mxu0 %v1769
  %v1924 = vpop.f32.mrb[0].mxu0
  %v1925 = vadd.f32 0.0, %v1924
  %v1926 = vpop.f32.mrb[0].mxu0
  %v1927 = vpop.f32.mrb[0].mxu0
  %v1928 = vadd.f32 0.0, %v1927
  %v1929 = vpop.f32.mrb[0].mxu0
  %1930 = vdwg.mxu0
  %v1931 = vtanh.pop %v1869
  %v1932 = vtanh.pop %v1872
  %v1933 = vtanh.pop %v1877
  %v1934 = vtanh.pop %v1880
  %v1935 = vtanh.pop %v1885
  %v1936 = vtanh.pop %v1888
  %v1937 = vtanh.pop %v1893
  %v1938 = vtanh.pop %v1896
  %v1939 = vtanh.pop %v1901
  %v1940 = vtanh.pop %v1904
  %v1941 = vtanh.pop %v1909
  %v1942 = vtanh.pop %v1912
  %v1943 = vtanh.pop %v1917
  %v1944 = vtanh.pop %v1920
  %v1945 = vtanh.pop %v1925
  %v1946 = vtanh.pop %v1928
  %1947 = vst [vmem:[%s11] sm:$0xff] %v1931
  %1948 = vst [vmem:[%s11 + $0x8] sm:$0xff] %v1932
  %1949 = vst [vmem:[%s11 + $0x10] sm:$0xff] %v1933
  %1950 = vst [vmem:[%s11 + $0x18] sm:$0xff] %v1934
  %1951 = vst [vmem:[%s11 + $0x20] sm:$0xff] %v1935
  %1952 = vst [vmem:[%s11 + $0x28] sm:$0xff] %v1936
  %1953 = vst [vmem:[%s11 + $0x30] sm:$0xff] %v1937
  %1954 = vst [vmem:[%s11 + $0x38] sm:$0xff] %v1938
  %1955 = vst [vmem:[%s11 + $0x40] sm:$0xff] %v1939
  %1956 = vst [vmem:[%s11 + $0x48] sm:$0xff] %v1940
  %1957 = vst [vmem:[%s11 + $0x50] sm:$0xff] %v1941
  %1958 = vst [vmem:[%s11 + $0x58] sm:$0xff] %v1942
  %1959 = vst [vmem:[%s11 + $0x60] sm:$0xff] %v1943
  %1960 = vst [vmem:[%s11 + $0x68] sm:$0xff] %v1944
  %1961 = vst [vmem:[%s11 + $0x70] sm:$0xff] %v1945
  %1962 = vst [vmem:[%s11 + $0x78] sm:$0xff] %v1946
  // Predicated region
  $region26: #{gin_forward.1} parent=0 // pred_check
    _
  $region27: #{gin_forward.1} parent=0 // pred_check_branch
    %1964 = sbr.rel (0) target = $region29
  $region28: #{gin_forward.1} parent=0 // pred_region
    _
  $region29: #{gin_forward.1} parent=0 // pred_fallthru
    _
  // Predicated region
  $region30: #{gin_forward.1} parent=0 // pred_check
    _
  $region31: #{gin_forward.1} parent=0 // pred_check_branch
    %1966 = sbr.rel (0) target = $region33
  $region32: #{gin_forward.1} parent=0 // pred_region
    _
  $region33: #{gin_forward.1} parent=0 // pred_fallthru
    _
  // Predicated region
  $region34: #{gin_forward.1} parent=0 // pred_check
    _
  $region35: #{gin_forward.1} parent=0 // pred_check_branch
    %1968 = sbr.rel (0) target = $region37
  $region36: #{gin_forward.1} parent=0 // pred_region
    _
  $region37: #{gin_forward.1} parent=0 // pred_fallthru
    _
  // Predicated region
  $region38: #{gin_forward.1} parent=0 // pred_check
    _
  $region39: #{gin_forward.1} parent=0 // pred_check_branch
    %1970 = sbr.rel (0) target = $region41
  $region40: #{gin_forward.1} parent=0 // pred_region
    _
  $region41: #{gin_forward.1} parent=0 // pred_fallthru
    _
  // Predicated region
  $region42: #{gin_forward.1} parent=0 // pred_check
    _
  $region43: #{gin_forward.1} parent=0 // pred_check_branch
    %1972 = sbr.rel (0) target = $region45
  $region44: #{gin_forward.1} parent=0 // pred_region
    _
  $region45: #{gin_forward.1} parent=0 // pred_fallthru
    _
  // Predicated region
  $region46: #{gin_forward.1} parent=0 // pred_check
    _
  $region47: #{gin_forward.1} parent=0 // pred_check_branch
    %1974 = sbr.rel (0) target = $region49
  $region48: #{gin_forward.1} parent=0 // pred_region
    _
  $region49: #{gin_forward.1} parent=0 // pred_fallthru
    _
  // Predicated region
  $region50: #{gin_forward.1} parent=0 // pred_check
    _
  $region51: #{gin_forward.1} parent=0 // pred_check_branch
    %1976 = sbr.rel (0) target = $region53
  $region52: #{gin_forward.1} parent=0 // pred_region
    _
  $region53: #{gin_forward.1} parent=0 // pred_fallthru
    _
  // Predicated region
  $region54: #{gin_forward.1} parent=0 // pred_check
    _
  $region55: #{gin_forward.1} parent=0 // pred_check_branch
    %1978 = sbr.rel (0) target = $region57
  $region56: #{gin_forward.1} parent=0 // pred_region
    _
  $region57: #{gin_forward.1} parent=0 // pred_fallthru
    _
  // Predicated region
  $region58: #{gin_forward.1} parent=0 // pred_check
    _
  $region59: #{gin_forward.1} parent=0 // pred_check_branch
    %1980 = sbr.rel (0) target = $region61
  $region60: #{gin_forward.1} parent=0 // pred_region
    _
  $region61: #{gin_forward.1} parent=0 // pred_fallthru
    _
  // Predicated region
  $region62: #{gin_forward.1} parent=0 // pred_check
    _
  $region63: #{gin_forward.1} parent=0 // pred_check_branch
    %1982 = sbr.rel (0) target = $region65
  $region64: #{gin_forward.1} parent=0 // pred_region
    _
  $region65: #{gin_forward.1} parent=0 // pred_fallthru
    _
  // Predicated region
  $region66: #{gin_forward.1} parent=0 // pred_check
    _
  $region67: #{gin_forward.1} parent=0 // pred_check_branch
    %1984 = sbr.rel (0) target = $region69
  $region68: #{gin_forward.1} parent=0 // pred_region
    _
  $region69: #{gin_forward.1} parent=0 // pred_fallthru
    _
  // Predicated region
  $region70: #{gin_forward.1} parent=0 // pred_check
    _
  $region71: #{gin_forward.1} parent=0 // pred_check_branch
    %1986 = sbr.rel (0) target = $region73
  $region72: #{gin_forward.1} parent=0 // pred_region
    _
  $region73: #{gin_forward.1} parent=0 // pred_fallthru
    _

</llo_original>
